<compile_context>
chip_gen: v6e
topology: v6e:2x2x1
jax: 0.10.0
libtpu: 0.0.40
codegen_flags: <defaults>
</compile_context>

<pallas_src>
import functools

import jax
import jax.numpy as jnp
from jax.experimental import pallas as pl
from jax.experimental.pallas import tpu as pltpu


def _silu(v):
    # SiLU(x) = x * sigmoid(x) = 0.5 * x * (tanh(0.5 * x) + 1)
    # tanh -> single EUP op; the two muls + add go to the VPU.
    return 0.5 * v * (jnp.tanh(0.5 * v) + 1.0)


def fcnet_kernel(x_ref, w1_ref, b1_ref, w2_ref, b2_ref,
                 w23_ref, b23_ref, w3_ref, b3_ref, o_ref):
    # x_ref : (D, tb)  f32   -- batch on lanes
    # w1_ref: (W, D)   f32,  b1_ref : (W, 1) f32
    # w2_ref/w23_ref: (W, W) f32,   b2_ref/b23_ref: (W, 1) f32
    # w3_ref: (1, W)   f32,  b3_ref : (1, 1) f32
    # o_ref : (1, tb)  f32   -- lane-dense output store
    x = x_ref[...]

    # Layer 1: (W, D) x (D, tb) on the MXU (K=4, f32 operands, f32 accumulation).
    h = _silu(jnp.dot(w1_ref[...], x, preferred_element_type=jnp.float32)
              + b1_ref[...])

    # Layers 2 / 23: (W, W) x (W, tb) MXU matmuls, fused bias + SiLU tail in f32.
    h = _silu(jnp.dot(w2_ref[...], h, preferred_element_type=jnp.float32)
              + b2_ref[...])
    h = _silu(jnp.dot(w23_ref[...], h, preferred_element_type=jnp.float32)
              + b23_ref[...])

    # Layer 3 (out_features = 1): (1, W) x (W, tb) on the MXU.
    o = jnp.dot(w3_ref[...], h, preferred_element_type=jnp.float32) + b3_ref[...]
    o_ref[...] = o.astype(o_ref.dtype)


def _pick_tile_and_pad(batch):
    """Return (tb, padded_batch).

    <= 2048 lanes: one grid step (best for single-TC v5e/v6e, fits scoped VMEM).
    >  2048      : 2048-wide tiles, padded to an even step count (v7x: 2 TCs)."""
    b128 = pl.cdiv(batch, 128) * 128
    if b128 <= 2048:
        return int(b128), int(b128)
    tb = 2048
    steps = pl.cdiv(b128, tb)
    if steps % 2:
        steps += 1
    return tb, int(steps * tb)


@functools.partial(jax.jit, static_argnames=("tb",))
def fcnet_forward(x, params, *, tb=None):
    """x: (B, D) float32; params from init_params. Returns (B, 1) float32."""
    B, D = x.shape

    if tb is None:
        tb, Bp = _pick_tile_and_pad(B)
    else:
        Bp = pl.cdiv(B, tb) * tb

    # Batch-on-lanes layout: transpose x, weights stored (out, in), biases as columns.
    xT = x.T                                    # (D, B)
    if Bp != B:
        xT = jnp.pad(xT, ((0, 0), (0, Bp - B)))

    w1t = params["w1"].T                        # (W, D)  f32
    b1c = params["b1"].reshape(-1, 1)           # (W, 1)  f32
    w2t = params["w2"].T                        # (W, W)  f32
    b2c = params["b2"].reshape(-1, 1)
    w23t = params["w23"].T
    b23c = params["b23"].reshape(-1, 1)
    w3r = params["w3"].T                        # (1, W)  f32
    b3c = params["b3"].reshape(1, 1)            # (1, 1)  f32

    grid = (Bp // tb,)
    # Parameters: full-array blocks with constant index_map (re-used across the grid).
    full = lambda a: pl.BlockSpec(a.shape, lambda i: (0, 0))

    out_t = pl.pallas_call(
        fcnet_kernel,
        out_shape=jax.ShapeDtypeStruct((1, Bp), jnp.float32),
        grid_spec=pltpu.PrefetchScalarGridSpec(
            num_scalar_prefetch=0,
            grid=grid,
            in_specs=[
                pl.BlockSpec((D, tb), lambda i: (0, i)),   # x tile, batch on lanes
                full(w1t), full(b1c),
                full(w2t), full(b2c),
                full(w23t), full(b23c),
                full(w3r), full(b3c),
            ],
            out_specs=pl.BlockSpec((1, tb), lambda i: (0, i)),
        ),
        compiler_params=pltpu.CompilerParams(
            dimension_semantics=("parallel",)),
    )(xT, w1t, b1c, w2t, b2c, w23t, b23c, w3r, b3c)

    return out_t[:, :B].T                       # (B, 1)


def init_params(key, input_d=4, w=200):
    """Deterministic init mimicking torch.nn.Linear (uniform +/- 1/sqrt(fan_in))."""
    keys = jax.random.split(key, 8)

    def lin(kw, kb, fan_in, fan_out):
        bound = 1.0 / jnp.sqrt(fan_in)
        weight = jax.random.uniform(kw, (fan_in, fan_out), jnp.float32, -bound, bound)
        bias = jax.random.uniform(kb, (fan_out,), jnp.float32, -bound, bound)
        return weight, bias

    w1, b1 = lin(keys[0], keys[1], input_d, w)
    w2, b2 = lin(keys[2], keys[3], w, w)
    w23, b23 = lin(keys[4], keys[5], w, w)
    w3, b3 = lin(keys[6], keys[7], w, 1)
    return {"w1": w1, "b1": b1, "w2": w2, "b2": b2,
            "w23": w23, "b23": b23, "w3": w3, "b3": b3}


def fcnet_reference(x, params):
    """Pure-JAX f32 reference matching the PyTorch module's forward."""
    silu = lambda v: v * jax.nn.sigmoid(v)
    h = silu(jnp.dot(x, params["w1"]) + params["b1"])
    h = silu(jnp.dot(h, params["w2"]) + params["b2"])
    h = silu(jnp.dot(h, params["w23"]) + params["b23"])
    return jnp.dot(h, params["w3"]) + params["b3"]


if __name__ == "__main__":
    key = jax.random.PRNGKey(0)
    k_x, k_p = jax.random.split(key)

    B, input_d, w = 8, 4, 200
    # Inputs like (np.random.rand(N, 4) - 0.5) * train_box with train_box = 2.
    x = (jax.random.uniform(k_x, (B, input_d), jnp.float32) - 0.5) * 2.0
    params = init_params(k_p, input_d=input_d, w=w)

    out = fcnet_forward(x, params)
    out = jax.block_until_ready(out)
    assert out.shape == (B, 1)

    ref = fcnet_reference(x, params)
    assert jnp.allclose(out, ref, atol=1e-4, rtol=1e-4), \
        float(jnp.max(jnp.abs(out - ref)))

    print("KERNEL_OK")
</pallas_src>

<mosaic_0001>
module attributes {stable_mosaic.version = 11 : i64} {
  func.func @fcnet_kernel(%arg0: i32, %arg1: memref<4x128xf32, #tpu.memory_space<vmem>>, %arg2: memref<200x4xf32, #tpu.memory_space<vmem>>, %arg3: memref<200x1xf32, #tpu.memory_space<vmem>>, %arg4: memref<200x200xf32, #tpu.memory_space<vmem>>, %arg5: memref<200x1xf32, #tpu.memory_space<vmem>>, %arg6: memref<200x200xf32, #tpu.memory_space<vmem>>, %arg7: memref<200x1xf32, #tpu.memory_space<vmem>>, %arg8: memref<1x200xf32, #tpu.memory_space<vmem>>, %arg9: memref<1x1xf32, #tpu.memory_space<vmem>>, %arg10: memref<1x128xf32, #tpu.memory_space<vmem>>) attributes {dimension_semantics = [#tpu.dimension_semantics<parallel>], iteration_bounds = array<i64: 1>, scalar_prefetch = 0 : i64, scratch_operands = 0 : i64, tpu.core_type = #tpu.core_type<tc>, window_params = [{transform_indices = @transform_0, window_bounds = array<i64: 4, 128>}, {pipeline_mode = #tpu.pipeline_mode<synchronous>, transform_indices = @transform_1, window_bounds = array<i64: 200, 4>}, {pipeline_mode = #tpu.pipeline_mode<synchronous>, transform_indices = @transform_2, window_bounds = array<i64: 200, 1>}, {pipeline_mode = #tpu.pipeline_mode<synchronous>, transform_indices = @transform_3, window_bounds = array<i64: 200, 200>}, {pipeline_mode = #tpu.pipeline_mode<synchronous>, transform_indices = @transform_4, window_bounds = array<i64: 200, 1>}, {pipeline_mode = #tpu.pipeline_mode<synchronous>, transform_indices = @transform_5, window_bounds = array<i64: 200, 200>}, {pipeline_mode = #tpu.pipeline_mode<synchronous>, transform_indices = @transform_6, window_bounds = array<i64: 200, 1>}, {pipeline_mode = #tpu.pipeline_mode<synchronous>, transform_indices = @transform_7, window_bounds = array<i64: 1, 200>}, {pipeline_mode = #tpu.pipeline_mode<synchronous>, transform_indices = @transform_8, window_bounds = array<i64: 1, 1>}, {transform_indices = @transform_9, window_bounds = array<i64: 1, 128>}]} {
    %c0 = arith.constant 0 : index
    %c0_0 = arith.constant 0 : index
    %0 = vector.load %arg1[%c0, %c0_0] : memref<4x128xf32, #tpu.memory_space<vmem>>, vector<4x128xf32>
    %c0_1 = arith.constant 0 : index
    %c0_2 = arith.constant 0 : index
    %1 = vector.load %arg2[%c0_1, %c0_2] : memref<200x4xf32, #tpu.memory_space<vmem>>, vector<200x4xf32>
    %cst = arith.constant dense<0.000000e+00> : vector<200x128xf32>
    %2 = tpu.matmul %1, %0, %cst {dimension_numbers = #tpu.dot_dimension_numbers<[1], [0], [0], [1], [0, 0, 1, 1], [], []>} : vector<200x4xf32>, vector<4x128xf32>, vector<200x128xf32> -> vector<200x128xf32>
    %c0_3 = arith.constant 0 : index
    %c0_4 = arith.constant 0 : index
    %3 = vector.load %arg3[%c0_3, %c0_4] : memref<200x1xf32, #tpu.memory_space<vmem>>, vector<200x1xf32>
    %4 = vector.broadcast %3 : vector<200x1xf32> to vector<200x128xf32>
    %5 = arith.addf %2, %4 : vector<200x128xf32>
    %cst_5 = arith.constant 5.000000e-01 : f32
    %6 = vector.broadcast %cst_5 : f32 to vector<200x128xf32>
    %7 = arith.mulf %6, %5 : vector<200x128xf32>
    %cst_6 = arith.constant 5.000000e-01 : f32
    %8 = vector.broadcast %cst_6 : f32 to vector<200x128xf32>
    %9 = arith.mulf %8, %5 : vector<200x128xf32>
    %10 = math.tanh %9 : vector<200x128xf32>
    %cst_7 = arith.constant 1.000000e+00 : f32
    %11 = vector.broadcast %cst_7 : f32 to vector<200x128xf32>
    %12 = arith.addf %10, %11 : vector<200x128xf32>
    %13 = arith.mulf %7, %12 : vector<200x128xf32>
    %c0_8 = arith.constant 0 : index
    %c0_9 = arith.constant 0 : index
    %14 = vector.load %arg4[%c0_8, %c0_9] : memref<200x200xf32, #tpu.memory_space<vmem>>, vector<200x200xf32>
    %cst_10 = arith.constant dense<0.000000e+00> : vector<200x128xf32>
    %15 = tpu.matmul %14, %13, %cst_10 {dimension_numbers = #tpu.dot_dimension_numbers<[1], [0], [0], [1], [0, 0, 1, 1], [], []>} : vector<200x200xf32>, vector<200x128xf32>, vector<200x128xf32> -> vector<200x128xf32>
    %c0_11 = arith.constant 0 : index
    %c0_12 = arith.constant 0 : index
    %16 = vector.load %arg5[%c0_11, %c0_12] : memref<200x1xf32, #tpu.memory_space<vmem>>, vector<200x1xf32>
    %17 = vector.broadcast %16 : vector<200x1xf32> to vector<200x128xf32>
    %18 = arith.addf %15, %17 : vector<200x128xf32>
    %cst_13 = arith.constant 5.000000e-01 : f32
    %19 = vector.broadcast %cst_13 : f32 to vector<200x128xf32>
    %20 = arith.mulf %19, %18 : vector<200x128xf32>
    %cst_14 = arith.constant 5.000000e-01 : f32
    %21 = vector.broadcast %cst_14 : f32 to vector<200x128xf32>
    %22 = arith.mulf %21, %18 : vector<200x128xf32>
    %23 = math.tanh %22 : vector<200x128xf32>
    %cst_15 = arith.constant 1.000000e+00 : f32
    %24 = vector.broadcast %cst_15 : f32 to vector<200x128xf32>
    %25 = arith.addf %23, %24 : vector<200x128xf32>
    %26 = arith.mulf %20, %25 : vector<200x128xf32>
    %c0_16 = arith.constant 0 : index
    %c0_17 = arith.constant 0 : index
    %27 = vector.load %arg6[%c0_16, %c0_17] : memref<200x200xf32, #tpu.memory_space<vmem>>, vector<200x200xf32>
    %cst_18 = arith.constant dense<0.000000e+00> : vector<200x128xf32>
    %28 = tpu.matmul %27, %26, %cst_18 {dimension_numbers = #tpu.dot_dimension_numbers<[1], [0], [0], [1], [0, 0, 1, 1], [], []>} : vector<200x200xf32>, vector<200x128xf32>, vector<200x128xf32> -> vector<200x128xf32>
    %c0_19 = arith.constant 0 : index
    %c0_20 = arith.constant 0 : index
    %29 = vector.load %arg7[%c0_19, %c0_20] : memref<200x1xf32, #tpu.memory_space<vmem>>, vector<200x1xf32>
    %30 = vector.broadcast %29 : vector<200x1xf32> to vector<200x128xf32>
    %31 = arith.addf %28, %30 : vector<200x128xf32>
    %cst_21 = arith.constant 5.000000e-01 : f32
    %32 = vector.broadcast %cst_21 : f32 to vector<200x128xf32>
    %33 = arith.mulf %32, %31 : vector<200x128xf32>
    %cst_22 = arith.constant 5.000000e-01 : f32
    %34 = vector.broadcast %cst_22 : f32 to vector<200x128xf32>
    %35 = arith.mulf %34, %31 : vector<200x128xf32>
    %36 = math.tanh %35 : vector<200x128xf32>
    %cst_23 = arith.constant 1.000000e+00 : f32
    %37 = vector.broadcast %cst_23 : f32 to vector<200x128xf32>
    %38 = arith.addf %36, %37 : vector<200x128xf32>
    %39 = arith.mulf %33, %38 : vector<200x128xf32>
    %c0_24 = arith.constant 0 : index
    %c0_25 = arith.constant 0 : index
    %40 = vector.load %arg8[%c0_24, %c0_25] : memref<1x200xf32, #tpu.memory_space<vmem>>, vector<1x200xf32>
    %cst_26 = arith.constant dense<0.000000e+00> : vector<1x128xf32>
    %41 = tpu.matmul %40, %39, %cst_26 {dimension_numbers = #tpu.dot_dimension_numbers<[1], [0], [0], [1], [0, 0, 1, 1], [], []>} : vector<1x200xf32>, vector<200x128xf32>, vector<1x128xf32> -> vector<1x128xf32>
    %c0_27 = arith.constant 0 : index
    %c0_28 = arith.constant 0 : index
    %42 = vector.load %arg9[%c0_27, %c0_28] : memref<1x1xf32, #tpu.memory_space<vmem>>, vector<1x1xf32>
    %43 = vector.broadcast %42 : vector<1x1xf32> to vector<1x128xf32>
    %44 = arith.addf %41, %43 : vector<1x128xf32>
    %c0_29 = arith.constant 0 : index
    %c0_30 = arith.constant 0 : index
    %45 = vector.load %arg10[%c0_29, %c0_30] : memref<1x128xf32, #tpu.memory_space<vmem>>, vector<1x128xf32>
    tpu.vector_store %arg10[%c0_29, %c0_30], %44 {strides = array<i32>} : memref<1x128xf32, #tpu.memory_space<vmem>>, vector<1x128xf32>,
    return
  }
  func.func @transform_0(%arg0: i32) -> (i32, i32) {
    %c0_i32 = arith.constant 0 : i32
    %c0_i32_0 = arith.constant 0 : i32
    return %c0_i32, %arg0 : i32, i32
  }
  func.func @transform_1(%arg0: i32) -> (i32, i32) {
    %c0_i32 = arith.constant 0 : i32
    %c0_i32_0 = arith.constant 0 : i32
    %c0_i32_1 = arith.constant 0 : i32
    return %c0_i32, %c0_i32_0 : i32, i32
  }
  func.func @transform_2(%arg0: i32) -> (i32, i32) {
    %c0_i32 = arith.constant 0 : i32
    %c0_i32_0 = arith.constant 0 : i32
    %c0_i32_1 = arith.constant 0 : i32
    return %c0_i32, %c0_i32_0 : i32, i32
  }
  func.func @transform_3(%arg0: i32) -> (i32, i32) {
    %c0_i32 = arith.constant 0 : i32
    %c0_i32_0 = arith.constant 0 : i32
    %c0_i32_1 = arith.constant 0 : i32
    return %c0_i32, %c0_i32_0 : i32, i32
  }
  func.func @transform_4(%arg0: i32) -> (i32, i32) {
    %c0_i32 = arith.constant 0 : i32
    %c0_i32_0 = arith.constant 0 : i32
    %c0_i32_1 = arith.constant 0 : i32
    return %c0_i32, %c0_i32_0 : i32, i32
  }
  func.func @transform_5(%arg0: i32) -> (i32, i32) {
    %c0_i32 = arith.constant 0 : i32
    %c0_i32_0 = arith.constant 0 : i32
    %c0_i32_1 = arith.constant 0 : i32
    return %c0_i32, %c0_i32_0 : i32, i32
  }
  func.func @transform_6(%arg0: i32) -> (i32, i32) {
    %c0_i32 = arith.constant 0 : i32
    %c0_i32_0 = arith.constant 0 : i32
    %c0_i32_1 = arith.constant 0 : i32
    return %c0_i32, %c0_i32_0 : i32, i32
  }
  func.func @transform_7(%arg0: i32) -> (i32, i32) {
    %c0_i32 = arith.constant 0 : i32
    %c0_i32_0 = arith.constant 0 : i32
    %c0_i32_1 = arith.constant 0 : i32
    return %c0_i32, %c0_i32_0 : i32, i32
  }
  func.func @transform_8(%arg0: i32) -> (i32, i32) {
    %c0_i32 = arith.constant 0 : i32
    %c0_i32_0 = arith.constant 0 : i32
    %c0_i32_1 = arith.constant 0 : i32
    return %c0_i32, %c0_i32_0 : i32, i32
  }
  func.func @transform_9(%arg0: i32) -> (i32, i32) {
    %c0_i32 = arith.constant 0 : i32
    %c0_i32_0 = arith.constant 0 : i32
    return %c0_i32, %arg0 : i32, i32
  }
}

</mosaic_0001>

<llo_original>
// kernel: fcnet_forward.1
$region0: #{fcnet_forward.1}
  #allocation0 [shape = 'u32[]', space=smem, size = 0x4, offset = 0x4, fixed_abs, tag = 'smem constant byte address 0x4 - core index']
  #allocation1 [shape = 'u32[144,128]{1,0:T(1,128)}', space=vmem, size = 0x12000, scoped, tag = 'internal scratch']
  #allocation2 [shape = 'f32[1,1]{1,0:T(1,128)S(1)}', space=vmem, size = 0x200, scoped, tag = 'scoped memory for fcnet_forward.1']
  %s0 = inlined_call_operand.vmem [shape: f32[4,128], index: 0, kind: input, shape index: {}]
  %s1 = inlined_call_operand.vmem [shape: f32[200,4], index: 1, kind: input, shape index: {}]
  %s2 = inlined_call_operand.vmem [shape: f32[200,1], index: 2, kind: input, shape index: {}]
  %s3 = inlined_call_operand.vmem [shape: f32[200,200], index: 3, kind: input, shape index: {}]
  %s4 = inlined_call_operand.vmem [shape: f32[200,1], index: 4, kind: input, shape index: {}]
  %s5 = inlined_call_operand.vmem [shape: f32[200,200], index: 5, kind: input, shape index: {}]
  %s6 = inlined_call_operand.vmem [shape: f32[200,1], index: 6, kind: input, shape index: {}]
  %s7 = inlined_call_operand.vmem [shape: f32[1,200], index: 7, kind: input, shape index: {}]
  %s8 = inlined_call_operand.<no memory space> [shape: f32[1,1], index: 8, kind: input, shape index: {}]
  %s9 = inlined_call_operand.vmem [shape: f32[1,128], index: 9, kind: output, shape index: {}]
  %s10 = sld [smem:[#allocation0]]
  $region46: #{fcnet_forward.1} parent=0
    _
  %s12 = ssub.s32 1, %s10
  %s13 = scalar_select 0, %s12, %s10
  %v14 = vstv %s8
  %15 = vst [vmem:[#allocation2] sm:$0x1] %v14
  // Predicated region
  $region2: #{fcnet_forward.1} parent=0 // pred_check
    _
  $region3: #{fcnet_forward.1} parent=0 // pred_check_branch
    %17 = sbr.rel (0) target = $region5
  $region4: #{fcnet_forward.1} parent=0 // pred_region
    _
  $region5: #{fcnet_forward.1} parent=0 // pred_fallthru
    _
  // Predicated region
  $region6: #{fcnet_forward.1} parent=0 // pred_check
    _
  $region7: #{fcnet_forward.1} parent=0 // pred_check_branch
    %19 = sbr.rel (0) target = $region9
  $region8: #{fcnet_forward.1} parent=0 // pred_region
    _
  $region9: #{fcnet_forward.1} parent=0 // pred_fallthru
    _
  // Predicated region
  $region10: #{fcnet_forward.1} parent=0 // pred_check
    _
  $region11: #{fcnet_forward.1} parent=0 // pred_check_branch
    %21 = sbr.rel (0) target = $region13
  $region12: #{fcnet_forward.1} parent=0 // pred_region
    _
  $region13: #{fcnet_forward.1} parent=0 // pred_fallthru
    _
  // Predicated region
  $region14: #{fcnet_forward.1} parent=0 // pred_check
    _
  $region15: #{fcnet_forward.1} parent=0 // pred_check_branch
    %23 = sbr.rel (0) target = $region17
  $region16: #{fcnet_forward.1} parent=0 // pred_region
    _
  $region17: #{fcnet_forward.1} parent=0 // pred_fallthru
    _
  // Predicated region
  $region18: #{fcnet_forward.1} parent=0 // pred_check
    _
  $region19: #{fcnet_forward.1} parent=0 // pred_check_branch
    %25 = sbr.rel (0) target = $region21
  $region20: #{fcnet_forward.1} parent=0 // pred_region
    _
  $region21: #{fcnet_forward.1} parent=0 // pred_fallthru
    _
  // Predicated region
  $region22: #{fcnet_forward.1} parent=0 // pred_check
    _
  $region23: #{fcnet_forward.1} parent=0 // pred_check_branch
    %27 = sbr.rel (0) target = $region25
  $region24: #{fcnet_forward.1} parent=0 // pred_region
    _
  $region25: #{fcnet_forward.1} parent=0 // pred_fallthru
    _
  // Predicated region
  $region26: #{fcnet_forward.1} parent=0 // pred_check
    _
  $region27: #{fcnet_forward.1} parent=0 // pred_check_branch
    %29 = sbr.rel (0) target = $region29
  $region28: #{fcnet_forward.1} parent=0 // pred_region
    _
  $region29: #{fcnet_forward.1} parent=0 // pred_fallthru
    _
  // Predicated region
  $region30: #{fcnet_forward.1} parent=0 // pred_check
    _
  $region31: #{fcnet_forward.1} parent=0 // pred_check_branch
    %31 = sbr.rel (0) target = $region33
  $region32: #{fcnet_forward.1} parent=0 // pred_region
    _
  $region33: #{fcnet_forward.1} parent=0 // pred_fallthru
    _
  // Predicated region
  $region34: #{fcnet_forward.1} parent=0 // pred_check
    _
  $region35: #{fcnet_forward.1} parent=0 // pred_check_branch
    %33 = sbr.rel (0) target = $region37
  $region36: #{fcnet_forward.1} parent=0 // pred_region
    _
  $region37: #{fcnet_forward.1} parent=0 // pred_fallthru
    _
  %v34 = vld [vmem:[%s0] sm:$0xf]
  %v35 = vld [vmem:[%s1] sm:$0xff]
  %v36 = vld [vmem:[%s1 + $0x8] sm:$0xff]
  %v37 = vld [vmem:[%s1 + $0x10] sm:$0xff]
  %v38 = vld [vmem:[%s1 + $0x18] sm:$0xff]
  %v39 = vld [vmem:[%s1 + $0x20] sm:$0xff]
  %v40 = vld [vmem:[%s1 + $0x28] sm:$0xff]
  %v41 = vld [vmem:[%s1 + $0x30] sm:$0xff]
  %v42 = vld [vmem:[%s1 + $0x38] sm:$0xff]
  %v43 = vld [vmem:[%s1 + $0x40] sm:$0xff]
  %v44 = vld [vmem:[%s1 + $0x48] sm:$0xff]
  %v45 = vld [vmem:[%s1 + $0x50] sm:$0xff]
  %v46 = vld [vmem:[%s1 + $0x58] sm:$0xff]
  %v47 = vld [vmem:[%s1 + $0x60] sm:$0xff]
  %v48 = vld [vmem:[%s1 + $0x68] sm:$0xff]
  %v49 = vld [vmem:[%s1 + $0x70] sm:$0xff]
  %v50 = vld [vmem:[%s1 + $0x78] sm:$0xff]
  %v51 = vld [vmem:[%s1 + $0x80] sm:$0xff]
  %v52 = vld [vmem:[%s1 + $0x88] sm:$0xff]
  %v53 = vld [vmem:[%s1 + $0x90] sm:$0xff]
  %v54 = vld [vmem:[%s1 + $0x98] sm:$0xff]
  %v55 = vld [vmem:[%s1 + $0xa0] sm:$0xff]
  %v56 = vld [vmem:[%s1 + $0xa8] sm:$0xff]
  %v57 = vld [vmem:[%s1 + $0xb0] sm:$0xff]
  %v58 = vld [vmem:[%s1 + $0xb8] sm:$0xff]
  %v59 = vld [vmem:[%s1 + $0xc0] sm:$0xff]
  %v60 = vld [vmem:[%s2] sm:$0xff]
  %v61 = vld [vmem:[%s2 + $0x8] sm:$0xff]
  %v62 = vld [vmem:[%s2 + $0x10] sm:$0xff]
  %v63 = vld [vmem:[%s2 + $0x18] sm:$0xff]
  %v64 = vld [vmem:[%s2 + $0x20] sm:$0xff]
  %v65 = vld [vmem:[%s2 + $0x28] sm:$0xff]
  %v66 = vld [vmem:[%s2 + $0x30] sm:$0xff]
  %v67 = vld [vmem:[%s2 + $0x38] sm:$0xff]
  %v68 = vld [vmem:[%s2 + $0x40] sm:$0xff]
  %v69 = vld [vmem:[%s2 + $0x48] sm:$0xff]
  %v70 = vld [vmem:[%s2 + $0x50] sm:$0xff]
  %v71 = vld [vmem:[%s2 + $0x58] sm:$0xff]
  %v72 = vld [vmem:[%s2 + $0x60] sm:$0xff]
  %v73 = vld [vmem:[%s2 + $0x68] sm:$0xff]
  %v74 = vld [vmem:[%s2 + $0x70] sm:$0xff]
  %v75 = vld [vmem:[%s2 + $0x78] sm:$0xff]
  %v76 = vld [vmem:[%s2 + $0x80] sm:$0xff]
  %v77 = vld [vmem:[%s2 + $0x88] sm:$0xff]
  %v78 = vld [vmem:[%s2 + $0x90] sm:$0xff]
  %v79 = vld [vmem:[%s2 + $0x98] sm:$0xff]
  %v80 = vld [vmem:[%s2 + $0xa0] sm:$0xff]
  %v81 = vld [vmem:[%s2 + $0xa8] sm:$0xff]
  %v82 = vld [vmem:[%s2 + $0xb0] sm:$0xff]
  %v83 = vld [vmem:[%s2 + $0xb8] sm:$0xff]
  %v84 = vld [vmem:[%s2 + $0xc0] sm:$0xff]
  %86 = vset.pattern.permute.xlu0 0
  %87 = vperm.xlu0 %86, %v60
  %v88 = vpop.permute.xlu0 %87
  %91 = vset.pattern.permute.xlu0 0
  %92 = vperm.xlu0 %91, %v61
  %v93 = vpop.permute.xlu0 %92
  %96 = vset.pattern.permute.xlu0 0
  %97 = vperm.xlu0 %96, %v62
  %v98 = vpop.permute.xlu0 %97
  %101 = vset.pattern.permute.xlu0 0
  %102 = vperm.xlu0 %101, %v63
  %v103 = vpop.permute.xlu0 %102
  %106 = vset.pattern.permute.xlu0 0
  %107 = vperm.xlu0 %106, %v64
  %v108 = vpop.permute.xlu0 %107
  %111 = vset.pattern.permute.xlu0 0
  %112 = vperm.xlu0 %111, %v65
  %v113 = vpop.permute.xlu0 %112
  %116 = vset.pattern.permute.xlu0 0
  %117 = vperm.xlu0 %116, %v66
  %v118 = vpop.permute.xlu0 %117
  %121 = vset.pattern.permute.xlu0 0
  %122 = vperm.xlu0 %121, %v67
  %v123 = vpop.permute.xlu0 %122
  %126 = vset.pattern.permute.xlu0 0
  %127 = vperm.xlu0 %126, %v68
  %v128 = vpop.permute.xlu0 %127
  %131 = vset.pattern.permute.xlu0 0
  %132 = vperm.xlu0 %131, %v69
  %v133 = vpop.permute.xlu0 %132
  %136 = vset.pattern.permute.xlu0 0
  %137 = vperm.xlu0 %136, %v70
  %v138 = vpop.permute.xlu0 %137
  %141 = vset.pattern.permute.xlu0 0
  %142 = vperm.xlu0 %141, %v71
  %v143 = vpop.permute.xlu0 %142
  %146 = vset.pattern.permute.xlu0 0
  %147 = vperm.xlu0 %146, %v72
  %v148 = vpop.permute.xlu0 %147
  %151 = vset.pattern.permute.xlu0 0
  %152 = vperm.xlu0 %151, %v73
  %v153 = vpop.permute.xlu0 %152
  %156 = vset.pattern.permute.xlu0 0
  %157 = vperm.xlu0 %156, %v74
  %v158 = vpop.permute.xlu0 %157
  %161 = vset.pattern.permute.xlu0 0
  %162 = vperm.xlu0 %161, %v75
  %v163 = vpop.permute.xlu0 %162
  %166 = vset.pattern.permute.xlu0 0
  %167 = vperm.xlu0 %166, %v76
  %v168 = vpop.permute.xlu0 %167
  %171 = vset.pattern.permute.xlu0 0
  %172 = vperm.xlu0 %171, %v77
  %v173 = vpop.permute.xlu0 %172
  %176 = vset.pattern.permute.xlu0 0
  %177 = vperm.xlu0 %176, %v78
  %v178 = vpop.permute.xlu0 %177
  %181 = vset.pattern.permute.xlu0 0
  %182 = vperm.xlu0 %181, %v79
  %v183 = vpop.permute.xlu0 %182
  %186 = vset.pattern.permute.xlu0 0
  %187 = vperm.xlu0 %186, %v80
  %v188 = vpop.permute.xlu0 %187
  %191 = vset.pattern.permute.xlu0 0
  %192 = vperm.xlu0 %191, %v81
  %v193 = vpop.permute.xlu0 %192
  %196 = vset.pattern.permute.xlu0 0
  %197 = vperm.xlu0 %196, %v82
  %v198 = vpop.permute.xlu0 %197
  %201 = vset.pattern.permute.xlu0 0
  %202 = vperm.xlu0 %201, %v83
  %v203 = vpop.permute.xlu0 %202
  %206 = vset.pattern.permute.xlu0 0
  %207 = vperm.xlu0 %206, %v84
  %v208 = vpop.permute.xlu0 %207
  %vm210 = vcmask 31744
  %v212 = vsel %vm210, %v35, 0
  %v215 = vsel %vm210, %v36, 0
  %v218 = vsel %vm210, %v37, 0
  %v221 = vsel %vm210, %v38, 0
  %v224 = vsel %vm210, %v39, 0
  %v227 = vsel %vm210, %v40, 0
  %v230 = vsel %vm210, %v41, 0
  %v233 = vsel %vm210, %v42, 0
  %v236 = vsel %vm210, %v43, 0
  %v239 = vsel %vm210, %v44, 0
  %v242 = vsel %vm210, %v45, 0
  %v245 = vsel %vm210, %v46, 0
  %v248 = vsel %vm210, %v47, 0
  %v251 = vsel %vm210, %v48, 0
  %v254 = vsel %vm210, %v49, 0
  %v257 = vsel %vm210, %v50, 0
  %v260 = vsel %vm210, %v51, 0
  %v263 = vsel %vm210, %v52, 0
  %v266 = vsel %vm210, %v53, 0
  %v269 = vsel %vm210, %v54, 0
  %v272 = vsel %vm210, %v55, 0
  %v275 = vsel %vm210, %v56, 0
  %v278 = vsel %vm210, %v57, 0
  %v281 = vsel %vm210, %v58, 0
  %v284 = vsel %vm210, %v59, 0
  %vm286 = vcmask 1043456
  %v288 = vsel %vm286, %v34, 0
  %290 = vmatprep.subr.mxu0 0.0
  %291 = vmatpush1.msra.mxu0 0.0
  %292 = vmatprep.subr.mxu0 0.0
  %293 = vmatpush1.msra.mxu0 0.0
  %294 = vmatprep.subr.mxu0 0.0
  %295 = vmatpush1.msra.mxu0 0.0
  %296 = vmatprep.subr.mxu0 0.0
  %297 = vmatpush1.msra.mxu0 0.0
  %298 = vmatprep.subr.mxu0 0.0
  %299 = vmatpush1.msra.mxu0 0.0
  %300 = vmatprep.subr.mxu0 0.0
  %301 = vmatpush1.msra.mxu0 0.0
  %302 = vmatprep.subr.mxu0 0.0
  %303 = vmatpush1.msra.mxu0 0.0
  %304 = vmatprep.subr.mxu0 0.0
  %305 = vmatpush1.msra.mxu0 0.0
  %306 = vmatprep.subr.mxu0 0.0
  %307 = vmatpush1.msra.mxu0 0.0
  %308 = vmatprep.subr.mxu0 0.0
  %309 = vmatpush1.msra.mxu0 0.0
  %310 = vmatprep.subr.mxu0 0.0
  %311 = vmatpush1.msra.mxu0 0.0
  %312 = vmatprep.subr.mxu0 0.0
  %313 = vmatpush1.msra.mxu0 0.0
  %314 = vmatprep.subr.mxu0 0.0
  %315 = vmatpush1.msra.mxu0 0.0
  %316 = vmatprep.subr.mxu0 0.0
  %317 = vmatpush1.msra.mxu0 0.0
  %318 = vmatprep.subr.mxu0 0.0
  %319 = vmatpush1.msra.mxu0 0.0
  %320 = vmatprep.subr.mxu0 0.0
  %321 = vmatpush1.msra.mxu0 %v288
  %322 = vmatprep.subr.mxu0 0.0
  %323 = vmatpush2.msra.mxu0 0.0
  %324 = vmatprep.subr.mxu0 0.0
  %325 = vmatpush2.msra.mxu0 0.0
  %326 = vmatprep.subr.mxu0 0.0
  %327 = vmatpush2.msra.mxu0 0.0
  %328 = vmatprep.subr.mxu0 0.0
  %329 = vmatpush2.msra.mxu0 0.0
  %330 = vmatprep.subr.mxu0 0.0
  %331 = vmatpush2.msra.mxu0 0.0
  %332 = vmatprep.subr.mxu0 0.0
  %333 = vmatpush2.msra.mxu0 0.0
  %334 = vmatprep.subr.mxu0 0.0
  %335 = vmatpush2.msra.mxu0 0.0
  %336 = vmatprep.subr.mxu0 0.0
  %337 = vmatpush2.msra.mxu0 0.0
  %338 = vmatprep.subr.mxu0 0.0
  %339 = vmatpush2.msra.mxu0 0.0
  %340 = vmatprep.subr.mxu0 0.0
  %341 = vmatpush2.msra.mxu0 0.0
  %342 = vmatprep.subr.mxu0 0.0
  %343 = vmatpush2.msra.mxu0 0.0
  %344 = vmatprep.subr.mxu0 0.0
  %345 = vmatpush2.msra.mxu0 0.0
  %346 = vmatprep.subr.mxu0 0.0
  %347 = vmatpush2.msra.mxu0 0.0
  %348 = vmatprep.subr.mxu0 0.0
  %349 = vmatpush2.msra.mxu0 0.0
  %350 = vmatprep.subr.mxu0 0.0
  %351 = vmatpush2.msra.mxu0 0.0
  %352 = vmatprep.subr.mxu0 0.0
  %353 = vmatpush2.msra.mxu0 0.0
  %354 = vmatprep.mubr.f32.mxu0 0.0
  %355 = vmatmul.mubr.f32.gmra.mxu0 %v212
  %v356 = vpop.f32.mrf.mxu0
  %v357 = vadd.f32 %v88, %v356
  %v358 = vpop.f32.mrf.mxu0
  %359 = vmatprep.mubr.f32.mxu0 0.0
  %360 = vmatmul.mubr.f32.gmra.mxu0 %v215
  %v361 = vpop.f32.mrf.mxu0
  %v362 = vadd.f32 %v93, %v361
  %v363 = vpop.f32.mrf.mxu0
  %364 = vmatprep.mubr.f32.mxu0 0.0
  %365 = vmatmul.mubr.f32.gmra.mxu0 %v218
  %v366 = vpop.f32.mrf.mxu0
  %v367 = vadd.f32 %v98, %v366
  %v368 = vpop.f32.mrf.mxu0
  %369 = vmatprep.mubr.f32.mxu0 0.0
  %370 = vmatmul.mubr.f32.gmra.mxu0 %v221
  %v371 = vpop.f32.mrf.mxu0
  %v372 = vadd.f32 %v103, %v371
  %v373 = vpop.f32.mrf.mxu0
  %374 = vmatprep.mubr.f32.mxu0 0.0
  %375 = vmatmul.mubr.f32.gmra.mxu0 %v224
  %v376 = vpop.f32.mrf.mxu0
  %v377 = vadd.f32 %v108, %v376
  %v378 = vpop.f32.mrf.mxu0
  %379 = vmatprep.mubr.f32.mxu0 0.0
  %380 = vmatmul.mubr.f32.gmra.mxu0 %v227
  %v381 = vpop.f32.mrf.mxu0
  %v382 = vadd.f32 %v113, %v381
  %v383 = vpop.f32.mrf.mxu0
  %384 = vmatprep.mubr.f32.mxu0 0.0
  %385 = vmatmul.mubr.f32.gmra.mxu0 %v230
  %v386 = vpop.f32.mrf.mxu0
  %v387 = vadd.f32 %v118, %v386
  %v388 = vpop.f32.mrf.mxu0
  %389 = vmatprep.mubr.f32.mxu0 0.0
  %390 = vmatmul.mubr.f32.gmra.mxu0 %v233
  %v391 = vpop.f32.mrf.mxu0
  %v392 = vadd.f32 %v123, %v391
  %v393 = vpop.f32.mrf.mxu0
  %394 = vmatprep.mubr.f32.mxu0 0.0
  %395 = vmatmul.mubr.f32.gmra.mxu0 %v236
  %v396 = vpop.f32.mrf.mxu0
  %v397 = vadd.f32 %v128, %v396
  %v398 = vpop.f32.mrf.mxu0
  %399 = vmatprep.mubr.f32.mxu0 0.0
  %400 = vmatmul.mubr.f32.gmra.mxu0 %v239
  %v401 = vpop.f32.mrf.mxu0
  %v402 = vadd.f32 %v133, %v401
  %v403 = vpop.f32.mrf.mxu0
  %404 = vmatprep.mubr.f32.mxu0 0.0
  %405 = vmatmul.mubr.f32.gmra.mxu0 %v242
  %v406 = vpop.f32.mrf.mxu0
  %v407 = vadd.f32 %v138, %v406
  %v408 = vpop.f32.mrf.mxu0
  %409 = vmatprep.mubr.f32.mxu0 0.0
  %410 = vmatmul.mubr.f32.gmra.mxu0 %v245
  %v411 = vpop.f32.mrf.mxu0
  %v412 = vadd.f32 %v143, %v411
  %v413 = vpop.f32.mrf.mxu0
  %414 = vmatprep.mubr.f32.mxu0 0.0
  %415 = vmatmul.mubr.f32.gmra.mxu0 %v248
  %v416 = vpop.f32.mrf.mxu0
  %v417 = vadd.f32 %v148, %v416
  %v418 = vpop.f32.mrf.mxu0
  %419 = vmatprep.mubr.f32.mxu0 0.0
  %420 = vmatmul.mubr.f32.gmra.mxu0 %v251
  %v421 = vpop.f32.mrf.mxu0
  %v422 = vadd.f32 %v153, %v421
  %v423 = vpop.f32.mrf.mxu0
  %424 = vmatprep.mubr.f32.mxu0 0.0
  %425 = vmatmul.mubr.f32.gmra.mxu0 %v254
  %v426 = vpop.f32.mrf.mxu0
  %v427 = vadd.f32 %v158, %v426
  %v428 = vpop.f32.mrf.mxu0
  %429 = vmatprep.mubr.f32.mxu0 0.0
  %430 = vmatmul.mubr.f32.gmra.mxu0 %v257
  %v431 = vpop.f32.mrf.mxu0
  %v432 = vadd.f32 %v163, %v431
  %v433 = vpop.f32.mrf.mxu0
  %434 = vmatprep.mubr.f32.mxu0 0.0
  %435 = vmatmul.mubr.f32.gmra.mxu0 %v260
  %v436 = vpop.f32.mrf.mxu0
  %v437 = vadd.f32 %v168, %v436
  %v438 = vpop.f32.mrf.mxu0
  %439 = vmatprep.mubr.f32.mxu0 0.0
  %440 = vmatmul.mubr.f32.gmra.mxu0 %v263
  %v441 = vpop.f32.mrf.mxu0
  %v442 = vadd.f32 %v173, %v441
  %v443 = vpop.f32.mrf.mxu0
  %444 = vmatprep.mubr.f32.mxu0 0.0
  %445 = vmatmul.mubr.f32.gmra.mxu0 %v266
  %v446 = vpop.f32.mrf.mxu0
  %v447 = vadd.f32 %v178, %v446
  %v448 = vpop.f32.mrf.mxu0
  %449 = vmatprep.mubr.f32.mxu0 0.0
  %450 = vmatmul.mubr.f32.gmra.mxu0 %v269
  %v451 = vpop.f32.mrf.mxu0
  %v452 = vadd.f32 %v183, %v451
  %v453 = vpop.f32.mrf.mxu0
  %454 = vmatprep.mubr.f32.mxu0 0.0
  %455 = vmatmul.mubr.f32.gmra.mxu0 %v272
  %v456 = vpop.f32.mrf.mxu0
  %v457 = vadd.f32 %v188, %v456
  %v458 = vpop.f32.mrf.mxu0
  %459 = vmatprep.mubr.f32.mxu0 0.0
  %460 = vmatmul.mubr.f32.gmra.mxu0 %v275
  %v461 = vpop.f32.mrf.mxu0
  %v462 = vadd.f32 %v193, %v461
  %v463 = vpop.f32.mrf.mxu0
  %464 = vmatprep.mubr.f32.mxu0 0.0
  %465 = vmatmul.mubr.f32.gmra.mxu0 %v278
  %v466 = vpop.f32.mrf.mxu0
  %v467 = vadd.f32 %v198, %v466
  %v468 = vpop.f32.mrf.mxu0
  %469 = vmatprep.mubr.f32.mxu0 0.0
  %470 = vmatmul.mubr.f32.gmra.mxu0 %v281
  %v471 = vpop.f32.mrf.mxu0
  %v472 = vadd.f32 %v203, %v471
  %v473 = vpop.f32.mrf.mxu0
  %474 = vmatprep.mubr.f32.mxu0 0.0
  %475 = vmatmul.mubr.f32.gmra.mxu0 %v284
  %v476 = vpop.f32.mrf.mxu0
  %v477 = vadd.f32 %v208, %v476
  %v478 = vpop.f32.mrf.mxu0
  %479 = vdwg.mxu0
  %v480 = vmul.f32 %v357, 0.5
  %v481 = vmul.f32 %v362, 0.5
  %v482 = vmul.f32 %v367, 0.5
  %v483 = vmul.f32 %v372, 0.5
  %v484 = vmul.f32 %v377, 0.5
  %v485 = vmul.f32 %v382, 0.5
  %v486 = vmul.f32 %v387, 0.5
  %v487 = vmul.f32 %v392, 0.5
  %v488 = vmul.f32 %v397, 0.5
  %v489 = vmul.f32 %v402, 0.5
  %v490 = vmul.f32 %v407, 0.5
  %v491 = vmul.f32 %v412, 0.5
  %v492 = vmul.f32 %v417, 0.5
  %v493 = vmul.f32 %v422, 0.5
  %v494 = vmul.f32 %v427, 0.5
  %v495 = vmul.f32 %v432, 0.5
  %v496 = vmul.f32 %v437, 0.5
  %v497 = vmul.f32 %v442, 0.5
  %v498 = vmul.f32 %v447, 0.5
  %v499 = vmul.f32 %v452, 0.5
  %v500 = vmul.f32 %v457, 0.5
  %v501 = vmul.f32 %v462, 0.5
  %v502 = vmul.f32 %v467, 0.5
  %v503 = vmul.f32 %v472, 0.5
  %v504 = vmul.f32 %v477, 0.5
  %v505 = vtanh.pop %v480
  %v506 = vtanh.pop %v481
  %v507 = vtanh.pop %v482
  %v508 = vtanh.pop %v483
  %v509 = vtanh.pop %v484
  %v510 = vtanh.pop %v485
  %v511 = vtanh.pop %v486
  %v512 = vtanh.pop %v487
  %v513 = vtanh.pop %v488
  %v514 = vtanh.pop %v489
  %v515 = vtanh.pop %v490
  %v516 = vtanh.pop %v491
  %v517 = vtanh.pop %v492
  %v518 = vtanh.pop %v493
  %v519 = vtanh.pop %v494
  %v520 = vtanh.pop %v495
  %v521 = vtanh.pop %v496
  %v522 = vtanh.pop %v497
  %v523 = vtanh.pop %v498
  %v524 = vtanh.pop %v499
  %v525 = vtanh.pop %v500
  %v526 = vtanh.pop %v501
  %v527 = vtanh.pop %v502
  %v528 = vtanh.pop %v503
  %v529 = vtanh.pop %v504
  %v530 = vadd.f32 %v505, 1.0
  %v531 = vadd.f32 %v506, 1.0
  %v532 = vadd.f32 %v507, 1.0
  %v533 = vadd.f32 %v508, 1.0
  %v534 = vadd.f32 %v509, 1.0
  %v535 = vadd.f32 %v510, 1.0
  %v536 = vadd.f32 %v511, 1.0
  %v537 = vadd.f32 %v512, 1.0
  %v538 = vadd.f32 %v513, 1.0
  %v539 = vadd.f32 %v514, 1.0
  %v540 = vadd.f32 %v515, 1.0
  %v541 = vadd.f32 %v516, 1.0
  %v542 = vadd.f32 %v517, 1.0
  %v543 = vadd.f32 %v518, 1.0
  %v544 = vadd.f32 %v519, 1.0
  %v545 = vadd.f32 %v520, 1.0
  %v546 = vadd.f32 %v521, 1.0
  %v547 = vadd.f32 %v522, 1.0
  %v548 = vadd.f32 %v523, 1.0
  %v549 = vadd.f32 %v524, 1.0
  %v550 = vadd.f32 %v525, 1.0
  %v551 = vadd.f32 %v526, 1.0
  %v552 = vadd.f32 %v527, 1.0
  %v553 = vadd.f32 %v528, 1.0
  %v554 = vadd.f32 %v529, 1.0
  %v555 = vmul.f32 %v480, %v530
  %v556 = vmul.f32 %v481, %v531
  %v557 = vmul.f32 %v482, %v532
  %v558 = vmul.f32 %v483, %v533
  %v559 = vmul.f32 %v484, %v534
  %v560 = vmul.f32 %v485, %v535
  %v561 = vmul.f32 %v486, %v536
  %v562 = vmul.f32 %v487, %v537
  %v563 = vmul.f32 %v488, %v538
  %v564 = vmul.f32 %v489, %v539
  %v565 = vmul.f32 %v490, %v540
  %v566 = vmul.f32 %v491, %v541
  %v567 = vmul.f32 %v492, %v542
  %v568 = vmul.f32 %v493, %v543
  %v569 = vmul.f32 %v494, %v544
  %v570 = vmul.f32 %v495, %v545
  %v571 = vmul.f32 %v496, %v546
  %v572 = vmul.f32 %v497, %v547
  %v573 = vmul.f32 %v498, %v548
  %v574 = vmul.f32 %v499, %v549
  %v575 = vmul.f32 %v500, %v550
  %v576 = vmul.f32 %v501, %v551
  %v577 = vmul.f32 %v502, %v552
  %v578 = vmul.f32 %v503, %v553
  %v579 = vmul.f32 %v504, %v554
  %v580 = vld [vmem:[%s3] sm:$0xff]
  %v581 = vld [vmem:[%s3 + $0x8] sm:$0xff]
  %v582 = vld [vmem:[%s3 + $0x10] sm:$0xff]
  %v583 = vld [vmem:[%s3 + $0x18] sm:$0xff]
  %v584 = vld [vmem:[%s3 + $0x20] sm:$0xff]
  %v585 = vld [vmem:[%s3 + $0x28] sm:$0xff]
  %v586 = vld [vmem:[%s3 + $0x30] sm:$0xff]
  %v587 = vld [vmem:[%s3 + $0x38] sm:$0xff]
  %v588 = vld [vmem:[%s3 + $0x40] sm:$0xff]
  %v589 = vld [vmem:[%s3 + $0x48] sm:$0xff]
  %v590 = vld [vmem:[%s3 + $0x50] sm:$0xff]
  %v591 = vld [vmem:[%s3 + $0x58] sm:$0xff]
  %v592 = vld [vmem:[%s3 + $0x60] sm:$0xff]
  %v593 = vld [vmem:[%s3 + $0x68] sm:$0xff]
  %v594 = vld [vmem:[%s3 + $0x70] sm:$0xff]
  %v595 = vld [vmem:[%s3 + $0x78] sm:$0xff]
  %v596 = vld [vmem:[%s3 + $0x80] sm:$0xff]
  %v597 = vld [vmem:[%s3 + $0x88] sm:$0xff]
  %v598 = vld [vmem:[%s3 + $0x90] sm:$0xff]
  %v599 = vld [vmem:[%s3 + $0x98] sm:$0xff]
  %v600 = vld [vmem:[%s3 + $0xa0] sm:$0xff]
  %v601 = vld [vmem:[%s3 + $0xa8] sm:$0xff]
  %v602 = vld [vmem:[%s3 + $0xb0] sm:$0xff]
  %v603 = vld [vmem:[%s3 + $0xb8] sm:$0xff]
  %v604 = vld [vmem:[%s3 + $0xc0] sm:$0xff]
  %v605 = vld [vmem:[%s3 + $0xc8] sm:$0xff]
  %v606 = vld [vmem:[%s3 + $0xd0] sm:$0xff]
  %v607 = vld [vmem:[%s3 + $0xd8] sm:$0xff]
  %v608 = vld [vmem:[%s3 + $0xe0] sm:$0xff]
  %v609 = vld [vmem:[%s3 + $0xe8] sm:$0xff]
  %v610 = vld [vmem:[%s3 + $0xf0] sm:$0xff]
  %v611 = vld [vmem:[%s3 + $0xf8] sm:$0xff]
  %v612 = vld [vmem:[%s3 + $0x100] sm:$0xff]
  %v613 = vld [vmem:[%s3 + $0x108] sm:$0xff]
  %v614 = vld [vmem:[%s3 + $0x110] sm:$0xff]
  %v615 = vld [vmem:[%s3 + $0x118] sm:$0xff]
  %v616 = vld [vmem:[%s3 + $0x120] sm:$0xff]
  %v617 = vld [vmem:[%s3 + $0x128] sm:$0xff]
  %v618 = vld [vmem:[%s3 + $0x130] sm:$0xff]
  %v619 = vld [vmem:[%s3 + $0x138] sm:$0xff]
  %v620 = vld [vmem:[%s3 + $0x140] sm:$0xff]
  %v621 = vld [vmem:[%s3 + $0x148] sm:$0xff]
  %v622 = vld [vmem:[%s3 + $0x150] sm:$0xff]
  %v623 = vld [vmem:[%s3 + $0x158] sm:$0xff]
  %v624 = vld [vmem:[%s3 + $0x160] sm:$0xff]
  %v625 = vld [vmem:[%s3 + $0x168] sm:$0xff]
  %v626 = vld [vmem:[%s3 + $0x170] sm:$0xff]
  %v627 = vld [vmem:[%s3 + $0x178] sm:$0xff]
  %v628 = vld [vmem:[%s3 + $0x180] sm:$0xff]
  %v629 = vld [vmem:[%s3 + $0x188] sm:$0xff]
  %v630 = vld [vmem:[%s4] sm:$0xff]
  %v631 = vld [vmem:[%s4 + $0x8] sm:$0xff]
  %v632 = vld [vmem:[%s4 + $0x10] sm:$0xff]
  %v633 = vld [vmem:[%s4 + $0x18] sm:$0xff]
  %v634 = vld [vmem:[%s4 + $0x20] sm:$0xff]
  %v635 = vld [vmem:[%s4 + $0x28] sm:$0xff]
  %v636 = vld [vmem:[%s4 + $0x30] sm:$0xff]
  %v637 = vld [vmem:[%s4 + $0x38] sm:$0xff]
  %v638 = vld [vmem:[%s4 + $0x40] sm:$0xff]
  %v639 = vld [vmem:[%s4 + $0x48] sm:$0xff]
  %v640 = vld [vmem:[%s4 + $0x50] sm:$0xff]
  %v641 = vld [vmem:[%s4 + $0x58] sm:$0xff]
  %v642 = vld [vmem:[%s4 + $0x60] sm:$0xff]
  %v643 = vld [vmem:[%s4 + $0x68] sm:$0xff]
  %v644 = vld [vmem:[%s4 + $0x70] sm:$0xff]
  %v645 = vld [vmem:[%s4 + $0x78] sm:$0xff]
  %v646 = vld [vmem:[%s4 + $0x80] sm:$0xff]
  %v647 = vld [vmem:[%s4 + $0x88] sm:$0xff]
  %v648 = vld [vmem:[%s4 + $0x90] sm:$0xff]
  %v649 = vld [vmem:[%s4 + $0x98] sm:$0xff]
  %v650 = vld [vmem:[%s4 + $0xa0] sm:$0xff]
  %v651 = vld [vmem:[%s4 + $0xa8] sm:$0xff]
  %v652 = vld [vmem:[%s4 + $0xb0] sm:$0xff]
  %v653 = vld [vmem:[%s4 + $0xb8] sm:$0xff]
  %v654 = vld [vmem:[%s4 + $0xc0] sm:$0xff]
  %656 = vset.pattern.permute.xlu0 0
  %657 = vperm.xlu0 %656, %v630
  %v658 = vpop.permute.xlu0 %657
  %661 = vset.pattern.permute.xlu0 0
  %662 = vperm.xlu0 %661, %v631
  %v663 = vpop.permute.xlu0 %662
  %666 = vset.pattern.permute.xlu0 0
  %667 = vperm.xlu0 %666, %v632
  %v668 = vpop.permute.xlu0 %667
  %671 = vset.pattern.permute.xlu0 0
  %672 = vperm.xlu0 %671, %v633
  %v673 = vpop.permute.xlu0 %672
  %676 = vset.pattern.permute.xlu0 0
  %677 = vperm.xlu0 %676, %v634
  %v678 = vpop.permute.xlu0 %677
  %681 = vset.pattern.permute.xlu0 0
  %682 = vperm.xlu0 %681, %v635
  %v683 = vpop.permute.xlu0 %682
  %686 = vset.pattern.permute.xlu0 0
  %687 = vperm.xlu0 %686, %v636
  %v688 = vpop.permute.xlu0 %687
  %691 = vset.pattern.permute.xlu0 0
  %692 = vperm.xlu0 %691, %v637
  %v693 = vpop.permute.xlu0 %692
  %696 = vset.pattern.permute.xlu0 0
  %697 = vperm.xlu0 %696, %v638
  %v698 = vpop.permute.xlu0 %697
  %701 = vset.pattern.permute.xlu0 0
  %702 = vperm.xlu0 %701, %v639
  %v703 = vpop.permute.xlu0 %702
  %706 = vset.pattern.permute.xlu0 0
  %707 = vperm.xlu0 %706, %v640
  %v708 = vpop.permute.xlu0 %707
  %711 = vset.pattern.permute.xlu0 0
  %712 = vperm.xlu0 %711, %v641
  %v713 = vpop.permute.xlu0 %712
  %716 = vset.pattern.permute.xlu0 0
  %717 = vperm.xlu0 %716, %v642
  %v718 = vpop.permute.xlu0 %717
  %721 = vset.pattern.permute.xlu0 0
  %722 = vperm.xlu0 %721, %v643
  %v723 = vpop.permute.xlu0 %722
  %726 = vset.pattern.permute.xlu0 0
  %727 = vperm.xlu0 %726, %v644
  %v728 = vpop.permute.xlu0 %727
  %731 = vset.pattern.permute.xlu0 0
  %732 = vperm.xlu0 %731, %v645
  %v733 = vpop.permute.xlu0 %732
  %736 = vset.pattern.permute.xlu0 0
  %737 = vperm.xlu0 %736, %v646
  %v738 = vpop.permute.xlu0 %737
  %741 = vset.pattern.permute.xlu0 0
  %742 = vperm.xlu0 %741, %v647
  %v743 = vpop.permute.xlu0 %742
  %746 = vset.pattern.permute.xlu0 0
  %747 = vperm.xlu0 %746, %v648
  %v748 = vpop.permute.xlu0 %747
  %751 = vset.pattern.permute.xlu0 0
  %752 = vperm.xlu0 %751, %v649
  %v753 = vpop.permute.xlu0 %752
  %756 = vset.pattern.permute.xlu0 0
  %757 = vperm.xlu0 %756, %v650
  %v758 = vpop.permute.xlu0 %757
  %761 = vset.pattern.permute.xlu0 0
  %762 = vperm.xlu0 %761, %v651
  %v763 = vpop.permute.xlu0 %762
  %766 = vset.pattern.permute.xlu0 0
  %767 = vperm.xlu0 %766, %v652
  %v768 = vpop.permute.xlu0 %767
  %771 = vset.pattern.permute.xlu0 0
  %772 = vperm.xlu0 %771, %v653
  %v773 = vpop.permute.xlu0 %772
  %776 = vset.pattern.permute.xlu0 0
  %777 = vperm.xlu0 %776, %v654
  %v778 = vpop.permute.xlu0 %777
  %vm780 = vcmask 588800
  %v782 = vsel %vm780, %v581, 0
  %v785 = vsel %vm780, %v583, 0
  %v788 = vsel %vm780, %v585, 0
  %v791 = vsel %vm780, %v587, 0
  %v794 = vsel %vm780, %v589, 0
  %v797 = vsel %vm780, %v591, 0
  %v800 = vsel %vm780, %v593, 0
  %v803 = vsel %vm780, %v595, 0
  %v806 = vsel %vm780, %v597, 0
  %v809 = vsel %vm780, %v599, 0
  %v812 = vsel %vm780, %v601, 0
  %v815 = vsel %vm780, %v603, 0
  %v818 = vsel %vm780, %v605, 0
  %v821 = vsel %vm780, %v607, 0
  %v824 = vsel %vm780, %v609, 0
  %v827 = vsel %vm780, %v611, 0
  %v830 = vsel %vm780, %v613, 0
  %v833 = vsel %vm780, %v615, 0
  %v836 = vsel %vm780, %v617, 0
  %v839 = vsel %vm780, %v619, 0
  %v842 = vsel %vm780, %v621, 0
  %v845 = vsel %vm780, %v623, 0
  %v848 = vsel %vm780, %v625, 0
  %v851 = vsel %vm780, %v627, 0
  %v854 = vsel %vm780, %v629, 0
  %856 = vmatprep.subr.mxu0 0.0
  %857 = vmatpush1.msra.mxu0 %v570
  %858 = vmatprep.subr.mxu0 0.0
  %859 = vmatpush1.msra.mxu0 %v569
  %860 = vmatprep.subr.mxu0 0.0
  %861 = vmatpush1.msra.mxu0 %v568
  %862 = vmatprep.subr.mxu0 0.0
  %863 = vmatpush1.msra.mxu0 %v567
  %864 = vmatprep.subr.mxu0 0.0
  %865 = vmatpush1.msra.mxu0 %v566
  %866 = vmatprep.subr.mxu0 0.0
  %867 = vmatpush1.msra.mxu0 %v565
  %868 = vmatprep.subr.mxu0 0.0
  %869 = vmatpush1.msra.mxu0 %v564
  %870 = vmatprep.subr.mxu0 0.0
  %871 = vmatpush1.msra.mxu0 %v563
  %872 = vmatprep.subr.mxu0 0.0
  %873 = vmatpush1.msra.mxu0 %v562
  %874 = vmatprep.subr.mxu0 0.0
  %875 = vmatpush1.msra.mxu0 %v561
  %876 = vmatprep.subr.mxu0 0.0
  %877 = vmatpush1.msra.mxu0 %v560
  %878 = vmatprep.subr.mxu0 0.0
  %879 = vmatpush1.msra.mxu0 %v559
  %880 = vmatprep.subr.mxu0 0.0
  %881 = vmatpush1.msra.mxu0 %v558
  %882 = vmatprep.subr.mxu0 0.0
  %883 = vmatpush1.msra.mxu0 %v557
  %884 = vmatprep.subr.mxu0 0.0
  %885 = vmatpush1.msra.mxu0 %v556
  %886 = vmatprep.subr.mxu0 0.0
  %887 = vmatpush1.msra.mxu0 %v555
  %888 = vmatprep.subr.mxu0 0.0
  %889 = vmatpush2.msra.mxu0 0.0
  %890 = vmatprep.subr.mxu0 0.0
  %891 = vmatpush2.msra.mxu0 0.0
  %892 = vmatprep.subr.mxu0 0.0
  %893 = vmatpush2.msra.mxu0 0.0
  %894 = vmatprep.subr.mxu0 0.0
  %895 = vmatpush2.msra.mxu0 0.0
  %896 = vmatprep.subr.mxu0 0.0
  %897 = vmatpush2.msra.mxu0 0.0
  %898 = vmatprep.subr.mxu0 0.0
  %899 = vmatpush2.msra.mxu0 0.0
  %900 = vmatprep.subr.mxu0 0.0
  %901 = vmatpush2.msra.mxu0 0.0
  %902 = vmatprep.subr.mxu0 0.0
  %903 = vmatpush2.msra.mxu0 %v579
  %904 = vmatprep.subr.mxu0 0.0
  %905 = vmatpush2.msra.mxu0 %v578
  %906 = vmatprep.subr.mxu0 0.0
  %907 = vmatpush2.msra.mxu0 %v577
  %908 = vmatprep.subr.mxu0 0.0
  %909 = vmatpush2.msra.mxu0 %v576
  %910 = vmatprep.subr.mxu0 0.0
  %911 = vmatpush2.msra.mxu0 %v575
  %912 = vmatprep.subr.mxu0 0.0
  %913 = vmatpush2.msra.mxu0 %v574
  %914 = vmatprep.subr.mxu0 0.0
  %915 = vmatpush2.msra.mxu0 %v573
  %916 = vmatprep.subr.mxu0 0.0
  %917 = vmatpush2.msra.mxu0 %v572
  %918 = vmatprep.subr.mxu0 0.0
  %919 = vmatpush2.msra.mxu0 %v571
  %920 = vmatprep.mubr.f32.mxu0 %v782
  %921 = vmatmul.mubr.f32.gmra.mxu0 %v580
  %v922 = vpop.f32.mrf.mxu0
  %v923 = vadd.f32 %v658, %v922
  %v924 = vpop.f32.mrf.mxu0
  %925 = vmatprep.mubr.f32.mxu0 %v785
  %926 = vmatmul.mubr.f32.gmra.mxu0 %v582
  %v927 = vpop.f32.mrf.mxu0
  %v928 = vadd.f32 %v663, %v927
  %v929 = vpop.f32.mrf.mxu0
  %930 = vmatprep.mubr.f32.mxu0 %v788
  %931 = vmatmul.mubr.f32.gmra.mxu0 %v584
  %v932 = vpop.f32.mrf.mxu0
  %v933 = vadd.f32 %v668, %v932
  %v934 = vpop.f32.mrf.mxu0
  %935 = vmatprep.mubr.f32.mxu0 %v791
  %936 = vmatmul.mubr.f32.gmra.mxu0 %v586
  %v937 = vpop.f32.mrf.mxu0
  %v938 = vadd.f32 %v673, %v937
  %v939 = vpop.f32.mrf.mxu0
  %940 = vmatprep.mubr.f32.mxu0 %v794
  %941 = vmatmul.mubr.f32.gmra.mxu0 %v588
  %v942 = vpop.f32.mrf.mxu0
  %v943 = vadd.f32 %v678, %v942
  %v944 = vpop.f32.mrf.mxu0
  %945 = vmatprep.mubr.f32.mxu0 %v797
  %946 = vmatmul.mubr.f32.gmra.mxu0 %v590
  %v947 = vpop.f32.mrf.mxu0
  %v948 = vadd.f32 %v683, %v947
  %v949 = vpop.f32.mrf.mxu0
  %950 = vmatprep.mubr.f32.mxu0 %v800
  %951 = vmatmul.mubr.f32.gmra.mxu0 %v592
  %v952 = vpop.f32.mrf.mxu0
  %v953 = vadd.f32 %v688, %v952
  %v954 = vpop.f32.mrf.mxu0
  %955 = vmatprep.mubr.f32.mxu0 %v803
  %956 = vmatmul.mubr.f32.gmra.mxu0 %v594
  %v957 = vpop.f32.mrf.mxu0
  %v958 = vadd.f32 %v693, %v957
  %v959 = vpop.f32.mrf.mxu0
  %960 = vmatprep.mubr.f32.mxu0 %v806
  %961 = vmatmul.mubr.f32.gmra.mxu0 %v596
  %v962 = vpop.f32.mrf.mxu0
  %v963 = vadd.f32 %v698, %v962
  %v964 = vpop.f32.mrf.mxu0
  %965 = vmatprep.mubr.f32.mxu0 %v809
  %966 = vmatmul.mubr.f32.gmra.mxu0 %v598
  %v967 = vpop.f32.mrf.mxu0
  %v968 = vadd.f32 %v703, %v967
  %v969 = vpop.f32.mrf.mxu0
  %970 = vmatprep.mubr.f32.mxu0 %v812
  %971 = vmatmul.mubr.f32.gmra.mxu0 %v600
  %v972 = vpop.f32.mrf.mxu0
  %v973 = vadd.f32 %v708, %v972
  %v974 = vpop.f32.mrf.mxu0
  %975 = vmatprep.mubr.f32.mxu0 %v815
  %976 = vmatmul.mubr.f32.gmra.mxu0 %v602
  %v977 = vpop.f32.mrf.mxu0
  %v978 = vadd.f32 %v713, %v977
  %v979 = vpop.f32.mrf.mxu0
  %980 = vmatprep.mubr.f32.mxu0 %v818
  %981 = vmatmul.mubr.f32.gmra.mxu0 %v604
  %v982 = vpop.f32.mrf.mxu0
  %v983 = vadd.f32 %v718, %v982
  %v984 = vpop.f32.mrf.mxu0
  %985 = vmatprep.mubr.f32.mxu0 %v821
  %986 = vmatmul.mubr.f32.gmra.mxu0 %v606
  %v987 = vpop.f32.mrf.mxu0
  %v988 = vadd.f32 %v723, %v987
  %v989 = vpop.f32.mrf.mxu0
  %990 = vmatprep.mubr.f32.mxu0 %v824
  %991 = vmatmul.mubr.f32.gmra.mxu0 %v608
  %v992 = vpop.f32.mrf.mxu0
  %v993 = vadd.f32 %v728, %v992
  %v994 = vpop.f32.mrf.mxu0
  %995 = vmatprep.mubr.f32.mxu0 %v827
  %996 = vmatmul.mubr.f32.gmra.mxu0 %v610
  %v997 = vpop.f32.mrf.mxu0
  %v998 = vadd.f32 %v733, %v997
  %v999 = vpop.f32.mrf.mxu0
  %1000 = vmatprep.mubr.f32.mxu0 %v830
  %1001 = vmatmul.mubr.f32.gmra.mxu0 %v612
  %v1002 = vpop.f32.mrf.mxu0
  %v1003 = vadd.f32 %v738, %v1002
  %v1004 = vpop.f32.mrf.mxu0
  %1005 = vmatprep.mubr.f32.mxu0 %v833
  %1006 = vmatmul.mubr.f32.gmra.mxu0 %v614
  %v1007 = vpop.f32.mrf.mxu0
  %v1008 = vadd.f32 %v743, %v1007
  %v1009 = vpop.f32.mrf.mxu0
  %1010 = vmatprep.mubr.f32.mxu0 %v836
  %1011 = vmatmul.mubr.f32.gmra.mxu0 %v616
  %v1012 = vpop.f32.mrf.mxu0
  %v1013 = vadd.f32 %v748, %v1012
  %v1014 = vpop.f32.mrf.mxu0
  %1015 = vmatprep.mubr.f32.mxu0 %v839
  %1016 = vmatmul.mubr.f32.gmra.mxu0 %v618
  %v1017 = vpop.f32.mrf.mxu0
  %v1018 = vadd.f32 %v753, %v1017
  %v1019 = vpop.f32.mrf.mxu0
  %1020 = vmatprep.mubr.f32.mxu0 %v842
  %1021 = vmatmul.mubr.f32.gmra.mxu0 %v620
  %v1022 = vpop.f32.mrf.mxu0
  %v1023 = vadd.f32 %v758, %v1022
  %v1024 = vpop.f32.mrf.mxu0
  %1025 = vmatprep.mubr.f32.mxu0 %v845
  %1026 = vmatmul.mubr.f32.gmra.mxu0 %v622
  %v1027 = vpop.f32.mrf.mxu0
  %v1028 = vadd.f32 %v763, %v1027
  %v1029 = vpop.f32.mrf.mxu0
  %1030 = vmatprep.mubr.f32.mxu0 %v848
  %1031 = vmatmul.mubr.f32.gmra.mxu0 %v624
  %v1032 = vpop.f32.mrf.mxu0
  %v1033 = vadd.f32 %v768, %v1032
  %v1034 = vpop.f32.mrf.mxu0
  %1035 = vmatprep.mubr.f32.mxu0 %v851
  %1036 = vmatmul.mubr.f32.gmra.mxu0 %v626
  %v1037 = vpop.f32.mrf.mxu0
  %v1038 = vadd.f32 %v773, %v1037
  %v1039 = vpop.f32.mrf.mxu0
  %1040 = vmatprep.mubr.f32.mxu0 %v854
  %1041 = vmatmul.mubr.f32.gmra.mxu0 %v628
  %v1042 = vpop.f32.mrf.mxu0
  %v1043 = vadd.f32 %v778, %v1042
  %v1044 = vpop.f32.mrf.mxu0
  %1045 = vdwg.mxu0
  %v1046 = vmul.f32 %v923, 0.5
  %v1047 = vmul.f32 %v928, 0.5
  %v1048 = vmul.f32 %v933, 0.5
  %v1049 = vmul.f32 %v938, 0.5
  %v1050 = vmul.f32 %v943, 0.5
  %v1051 = vmul.f32 %v948, 0.5
  %v1052 = vmul.f32 %v953, 0.5
  %v1053 = vmul.f32 %v958, 0.5
  %v1054 = vmul.f32 %v963, 0.5
  %v1055 = vmul.f32 %v968, 0.5
  %v1056 = vmul.f32 %v973, 0.5
  %v1057 = vmul.f32 %v978, 0.5
  %v1058 = vmul.f32 %v983, 0.5
  %v1059 = vmul.f32 %v988, 0.5
  %v1060 = vmul.f32 %v993, 0.5
  %v1061 = vmul.f32 %v998, 0.5
  %v1062 = vmul.f32 %v1003, 0.5
  %v1063 = vmul.f32 %v1008, 0.5
  %v1064 = vmul.f32 %v1013, 0.5
  %v1065 = vmul.f32 %v1018, 0.5
  %v1066 = vmul.f32 %v1023, 0.5
  %v1067 = vmul.f32 %v1028, 0.5
  %v1068 = vmul.f32 %v1033, 0.5
  %v1069 = vmul.f32 %v1038, 0.5
  %v1070 = vmul.f32 %v1043, 0.5
  %v1071 = vtanh.pop %v1046
  %v1072 = vtanh.pop %v1047
  %v1073 = vtanh.pop %v1048
  %v1074 = vtanh.pop %v1049
  %v1075 = vtanh.pop %v1050
  %v1076 = vtanh.pop %v1051
  %v1077 = vtanh.pop %v1052
  %v1078 = vtanh.pop %v1053
  %v1079 = vtanh.pop %v1054
  %v1080 = vtanh.pop %v1055
  %v1081 = vtanh.pop %v1056
  %v1082 = vtanh.pop %v1057
  %v1083 = vtanh.pop %v1058
  %v1084 = vtanh.pop %v1059
  %v1085 = vtanh.pop %v1060
  %v1086 = vtanh.pop %v1061
  %v1087 = vtanh.pop %v1062
  %v1088 = vtanh.pop %v1063
  %v1089 = vtanh.pop %v1064
  %v1090 = vtanh.pop %v1065
  %v1091 = vtanh.pop %v1066
  %v1092 = vtanh.pop %v1067
  %v1093 = vtanh.pop %v1068
  %v1094 = vtanh.pop %v1069
  %v1095 = vtanh.pop %v1070
  %v1096 = vadd.f32 %v1071, 1.0
  %v1097 = vadd.f32 %v1072, 1.0
  %v1098 = vadd.f32 %v1073, 1.0
  %v1099 = vadd.f32 %v1074, 1.0
  %v1100 = vadd.f32 %v1075, 1.0
  %v1101 = vadd.f32 %v1076, 1.0
  %v1102 = vadd.f32 %v1077, 1.0
  %v1103 = vadd.f32 %v1078, 1.0
  %v1104 = vadd.f32 %v1079, 1.0
  %v1105 = vadd.f32 %v1080, 1.0
  %v1106 = vadd.f32 %v1081, 1.0
  %v1107 = vadd.f32 %v1082, 1.0
  %v1108 = vadd.f32 %v1083, 1.0
  %v1109 = vadd.f32 %v1084, 1.0
  %v1110 = vadd.f32 %v1085, 1.0
  %v1111 = vadd.f32 %v1086, 1.0
  %v1112 = vadd.f32 %v1087, 1.0
  %v1113 = vadd.f32 %v1088, 1.0
  %v1114 = vadd.f32 %v1089, 1.0
  %v1115 = vadd.f32 %v1090, 1.0
  %v1116 = vadd.f32 %v1091, 1.0
  %v1117 = vadd.f32 %v1092, 1.0
  %v1118 = vadd.f32 %v1093, 1.0
  %v1119 = vadd.f32 %v1094, 1.0
  %v1120 = vadd.f32 %v1095, 1.0
  %v1121 = vmul.f32 %v1046, %v1096
  %v1122 = vmul.f32 %v1047, %v1097
  %v1123 = vmul.f32 %v1048, %v1098
  %v1124 = vmul.f32 %v1049, %v1099
  %v1125 = vmul.f32 %v1050, %v1100
  %v1126 = vmul.f32 %v1051, %v1101
  %v1127 = vmul.f32 %v1052, %v1102
  %v1128 = vmul.f32 %v1053, %v1103
  %v1129 = vmul.f32 %v1054, %v1104
  %v1130 = vmul.f32 %v1055, %v1105
  %v1131 = vmul.f32 %v1056, %v1106
  %v1132 = vmul.f32 %v1057, %v1107
  %v1133 = vmul.f32 %v1058, %v1108
  %v1134 = vmul.f32 %v1059, %v1109
  %v1135 = vmul.f32 %v1060, %v1110
  %v1136 = vmul.f32 %v1061, %v1111
  %v1137 = vmul.f32 %v1062, %v1112
  %v1138 = vmul.f32 %v1063, %v1113
  %v1139 = vmul.f32 %v1064, %v1114
  %v1140 = vmul.f32 %v1065, %v1115
  %v1141 = vmul.f32 %v1066, %v1116
  %v1142 = vmul.f32 %v1067, %v1117
  %v1143 = vmul.f32 %v1068, %v1118
  %v1144 = vmul.f32 %v1069, %v1119
  %v1145 = vmul.f32 %v1070, %v1120
  %v1146 = vld [vmem:[%s5] sm:$0xff]
  %v1147 = vld [vmem:[%s5 + $0x8] sm:$0xff]
  %v1148 = vld [vmem:[%s5 + $0x10] sm:$0xff]
  %v1149 = vld [vmem:[%s5 + $0x18] sm:$0xff]
  %v1150 = vld [vmem:[%s5 + $0x20] sm:$0xff]
  %v1151 = vld [vmem:[%s5 + $0x28] sm:$0xff]
  %v1152 = vld [vmem:[%s5 + $0x30] sm:$0xff]
  %v1153 = vld [vmem:[%s5 + $0x38] sm:$0xff]
  %v1154 = vld [vmem:[%s5 + $0x40] sm:$0xff]
  %v1155 = vld [vmem:[%s5 + $0x48] sm:$0xff]
  %v1156 = vld [vmem:[%s5 + $0x50] sm:$0xff]
  %v1157 = vld [vmem:[%s5 + $0x58] sm:$0xff]
  %v1158 = vld [vmem:[%s5 + $0x60] sm:$0xff]
  %v1159 = vld [vmem:[%s5 + $0x68] sm:$0xff]
  %v1160 = vld [vmem:[%s5 + $0x70] sm:$0xff]
  %v1161 = vld [vmem:[%s5 + $0x78] sm:$0xff]
  %v1162 = vld [vmem:[%s5 + $0x80] sm:$0xff]
  %v1163 = vld [vmem:[%s5 + $0x88] sm:$0xff]
  %v1164 = vld [vmem:[%s5 + $0x90] sm:$0xff]
  %v1165 = vld [vmem:[%s5 + $0x98] sm:$0xff]
  %v1166 = vld [vmem:[%s5 + $0xa0] sm:$0xff]
  %v1167 = vld [vmem:[%s5 + $0xa8] sm:$0xff]
  %v1168 = vld [vmem:[%s5 + $0xb0] sm:$0xff]
  %v1169 = vld [vmem:[%s5 + $0xb8] sm:$0xff]
  %v1170 = vld [vmem:[%s5 + $0xc0] sm:$0xff]
  %v1171 = vld [vmem:[%s5 + $0xc8] sm:$0xff]
  %v1172 = vld [vmem:[%s5 + $0xd0] sm:$0xff]
  %v1173 = vld [vmem:[%s5 + $0xd8] sm:$0xff]
  %v1174 = vld [vmem:[%s5 + $0xe0] sm:$0xff]
  %v1175 = vld [vmem:[%s5 + $0xe8] sm:$0xff]
  %v1176 = vld [vmem:[%s5 + $0xf0] sm:$0xff]
  %v1177 = vld [vmem:[%s5 + $0xf8] sm:$0xff]
  %v1178 = vld [vmem:[%s5 + $0x100] sm:$0xff]
  %v1179 = vld [vmem:[%s5 + $0x108] sm:$0xff]
  %v1180 = vld [vmem:[%s5 + $0x110] sm:$0xff]
  %v1181 = vld [vmem:[%s5 + $0x118] sm:$0xff]
  %v1182 = vld [vmem:[%s5 + $0x120] sm:$0xff]
  %v1183 = vld [vmem:[%s5 + $0x128] sm:$0xff]
  %v1184 = vld [vmem:[%s5 + $0x130] sm:$0xff]
  %v1185 = vld [vmem:[%s5 + $0x138] sm:$0xff]
  %v1186 = vld [vmem:[%s5 + $0x140] sm:$0xff]
  %v1187 = vld [vmem:[%s5 + $0x148] sm:$0xff]
  %v1188 = vld [vmem:[%s5 + $0x150] sm:$0xff]
  %v1189 = vld [vmem:[%s5 + $0x158] sm:$0xff]
  %v1190 = vld [vmem:[%s5 + $0x160] sm:$0xff]
  %v1191 = vld [vmem:[%s5 + $0x168] sm:$0xff]
  %v1192 = vld [vmem:[%s5 + $0x170] sm:$0xff]
  %v1193 = vld [vmem:[%s5 + $0x178] sm:$0xff]
  %v1194 = vld [vmem:[%s5 + $0x180] sm:$0xff]
  %v1195 = vld [vmem:[%s5 + $0x188] sm:$0xff]
  %v1196 = vld [vmem:[%s6] sm:$0xff]
  %v1197 = vld [vmem:[%s6 + $0x8] sm:$0xff]
  %v1198 = vld [vmem:[%s6 + $0x10] sm:$0xff]
  %v1199 = vld [vmem:[%s6 + $0x18] sm:$0xff]
  %v1200 = vld [vmem:[%s6 + $0x20] sm:$0xff]
  %v1201 = vld [vmem:[%s6 + $0x28] sm:$0xff]
  %v1202 = vld [vmem:[%s6 + $0x30] sm:$0xff]
  %v1203 = vld [vmem:[%s6 + $0x38] sm:$0xff]
  %v1204 = vld [vmem:[%s6 + $0x40] sm:$0xff]
  %v1205 = vld [vmem:[%s6 + $0x48] sm:$0xff]
  %v1206 = vld [vmem:[%s6 + $0x50] sm:$0xff]
  %v1207 = vld [vmem:[%s6 + $0x58] sm:$0xff]
  %v1208 = vld [vmem:[%s6 + $0x60] sm:$0xff]
  %v1209 = vld [vmem:[%s6 + $0x68] sm:$0xff]
  %v1210 = vld [vmem:[%s6 + $0x70] sm:$0xff]
  %v1211 = vld [vmem:[%s6 + $0x78] sm:$0xff]
  %v1212 = vld [vmem:[%s6 + $0x80] sm:$0xff]
  %v1213 = vld [vmem:[%s6 + $0x88] sm:$0xff]
  %v1214 = vld [vmem:[%s6 + $0x90] sm:$0xff]
  %v1215 = vld [vmem:[%s6 + $0x98] sm:$0xff]
  %v1216 = vld [vmem:[%s6 + $0xa0] sm:$0xff]
  %v1217 = vld [vmem:[%s6 + $0xa8] sm:$0xff]
  %v1218 = vld [vmem:[%s6 + $0xb0] sm:$0xff]
  %v1219 = vld [vmem:[%s6 + $0xb8] sm:$0xff]
  %v1220 = vld [vmem:[%s6 + $0xc0] sm:$0xff]
  %1222 = vset.pattern.permute.xlu0 0
  %1223 = vperm.xlu0 %1222, %v1196
  %v1224 = vpop.permute.xlu0 %1223
  %1227 = vset.pattern.permute.xlu0 0
  %1228 = vperm.xlu0 %1227, %v1197
  %v1229 = vpop.permute.xlu0 %1228
  %1232 = vset.pattern.permute.xlu0 0
  %1233 = vperm.xlu0 %1232, %v1198
  %v1234 = vpop.permute.xlu0 %1233
  %1237 = vset.pattern.permute.xlu0 0
  %1238 = vperm.xlu0 %1237, %v1199
  %v1239 = vpop.permute.xlu0 %1238
  %1242 = vset.pattern.permute.xlu0 0
  %1243 = vperm.xlu0 %1242, %v1200
  %v1244 = vpop.permute.xlu0 %1243
  %1247 = vset.pattern.permute.xlu0 0
  %1248 = vperm.xlu0 %1247, %v1201
  %v1249 = vpop.permute.xlu0 %1248
  %1252 = vset.pattern.permute.xlu0 0
  %1253 = vperm.xlu0 %1252, %v1202
  %v1254 = vpop.permute.xlu0 %1253
  %1257 = vset.pattern.permute.xlu0 0
  %1258 = vperm.xlu0 %1257, %v1203
  %v1259 = vpop.permute.xlu0 %1258
  %1262 = vset.pattern.permute.xlu0 0
  %1263 = vperm.xlu0 %1262, %v1204
  %v1264 = vpop.permute.xlu0 %1263
  %1267 = vset.pattern.permute.xlu0 0
  %1268 = vperm.xlu0 %1267, %v1205
  %v1269 = vpop.permute.xlu0 %1268
  %1272 = vset.pattern.permute.xlu0 0
  %1273 = vperm.xlu0 %1272, %v1206
  %v1274 = vpop.permute.xlu0 %1273
  %1277 = vset.pattern.permute.xlu0 0
  %1278 = vperm.xlu0 %1277, %v1207
  %v1279 = vpop.permute.xlu0 %1278
  %1282 = vset.pattern.permute.xlu0 0
  %1283 = vperm.xlu0 %1282, %v1208
  %v1284 = vpop.permute.xlu0 %1283
  %1287 = vset.pattern.permute.xlu0 0
  %1288 = vperm.xlu0 %1287, %v1209
  %v1289 = vpop.permute.xlu0 %1288
  %1292 = vset.pattern.permute.xlu0 0
  %1293 = vperm.xlu0 %1292, %v1210
  %v1294 = vpop.permute.xlu0 %1293
  %1297 = vset.pattern.permute.xlu0 0
  %1298 = vperm.xlu0 %1297, %v1211
  %v1299 = vpop.permute.xlu0 %1298
  %1302 = vset.pattern.permute.xlu0 0
  %1303 = vperm.xlu0 %1302, %v1212
  %v1304 = vpop.permute.xlu0 %1303
  %1307 = vset.pattern.permute.xlu0 0
  %1308 = vperm.xlu0 %1307, %v1213
  %v1309 = vpop.permute.xlu0 %1308
  %1312 = vset.pattern.permute.xlu0 0
  %1313 = vperm.xlu0 %1312, %v1214
  %v1314 = vpop.permute.xlu0 %1313
  %1317 = vset.pattern.permute.xlu0 0
  %1318 = vperm.xlu0 %1317, %v1215
  %v1319 = vpop.permute.xlu0 %1318
  %1322 = vset.pattern.permute.xlu0 0
  %1323 = vperm.xlu0 %1322, %v1216
  %v1324 = vpop.permute.xlu0 %1323
  %1327 = vset.pattern.permute.xlu0 0
  %1328 = vperm.xlu0 %1327, %v1217
  %v1329 = vpop.permute.xlu0 %1328
  %1332 = vset.pattern.permute.xlu0 0
  %1333 = vperm.xlu0 %1332, %v1218
  %v1334 = vpop.permute.xlu0 %1333
  %1337 = vset.pattern.permute.xlu0 0
  %1338 = vperm.xlu0 %1337, %v1219
  %v1339 = vpop.permute.xlu0 %1338
  %1342 = vset.pattern.permute.xlu0 0
  %1343 = vperm.xlu0 %1342, %v1220
  %v1344 = vpop.permute.xlu0 %1343
  %v1347 = vsel %vm780, %v1147, 0
  %v1350 = vsel %vm780, %v1149, 0
  %v1353 = vsel %vm780, %v1151, 0
  %v1356 = vsel %vm780, %v1153, 0
  %v1359 = vsel %vm780, %v1155, 0
  %v1362 = vsel %vm780, %v1157, 0
  %v1365 = vsel %vm780, %v1159, 0
  %v1368 = vsel %vm780, %v1161, 0
  %v1371 = vsel %vm780, %v1163, 0
  %v1374 = vsel %vm780, %v1165, 0
  %v1377 = vsel %vm780, %v1167, 0
  %v1380 = vsel %vm780, %v1169, 0
  %v1383 = vsel %vm780, %v1171, 0
  %v1386 = vsel %vm780, %v1173, 0
  %v1389 = vsel %vm780, %v1175, 0
  %v1392 = vsel %vm780, %v1177, 0
  %v1395 = vsel %vm780, %v1179, 0
  %v1398 = vsel %vm780, %v1181, 0
  %v1401 = vsel %vm780, %v1183, 0
  %v1404 = vsel %vm780, %v1185, 0
  %v1407 = vsel %vm780, %v1187, 0
  %v1410 = vsel %vm780, %v1189, 0
  %v1413 = vsel %vm780, %v1191, 0
  %v1416 = vsel %vm780, %v1193, 0
  %v1419 = vsel %vm780, %v1195, 0
  %1421 = vmatprep.subr.mxu0 0.0
  %1422 = vmatpush1.msra.mxu0 %v1136
  %1423 = vmatprep.subr.mxu0 0.0
  %1424 = vmatpush1.msra.mxu0 %v1135
  %1425 = vmatprep.subr.mxu0 0.0
  %1426 = vmatpush1.msra.mxu0 %v1134
  %1427 = vmatprep.subr.mxu0 0.0
  %1428 = vmatpush1.msra.mxu0 %v1133
  %1429 = vmatprep.subr.mxu0 0.0
  %1430 = vmatpush1.msra.mxu0 %v1132
  %1431 = vmatprep.subr.mxu0 0.0
  %1432 = vmatpush1.msra.mxu0 %v1131
  %1433 = vmatprep.subr.mxu0 0.0
  %1434 = vmatpush1.msra.mxu0 %v1130
  %1435 = vmatprep.subr.mxu0 0.0
  %1436 = vmatpush1.msra.mxu0 %v1129
  %1437 = vmatprep.subr.mxu0 0.0
  %1438 = vmatpush1.msra.mxu0 %v1128
  %1439 = vmatprep.subr.mxu0 0.0
  %1440 = vmatpush1.msra.mxu0 %v1127
  %1441 = vmatprep.subr.mxu0 0.0
  %1442 = vmatpush1.msra.mxu0 %v1126
  %1443 = vmatprep.subr.mxu0 0.0
  %1444 = vmatpush1.msra.mxu0 %v1125
  %1445 = vmatprep.subr.mxu0 0.0
  %1446 = vmatpush1.msra.mxu0 %v1124
  %1447 = vmatprep.subr.mxu0 0.0
  %1448 = vmatpush1.msra.mxu0 %v1123
  %1449 = vmatprep.subr.mxu0 0.0
  %1450 = vmatpush1.msra.mxu0 %v1122
  %1451 = vmatprep.subr.mxu0 0.0
  %1452 = vmatpush1.msra.mxu0 %v1121
  %1453 = vmatprep.subr.mxu0 0.0
  %1454 = vmatpush2.msra.mxu0 0.0
  %1455 = vmatprep.subr.mxu0 0.0
  %1456 = vmatpush2.msra.mxu0 0.0
  %1457 = vmatprep.subr.mxu0 0.0
  %1458 = vmatpush2.msra.mxu0 0.0
  %1459 = vmatprep.subr.mxu0 0.0
  %1460 = vmatpush2.msra.mxu0 0.0
  %1461 = vmatprep.subr.mxu0 0.0
  %1462 = vmatpush2.msra.mxu0 0.0
  %1463 = vmatprep.subr.mxu0 0.0
  %1464 = vmatpush2.msra.mxu0 0.0
  %1465 = vmatprep.subr.mxu0 0.0
  %1466 = vmatpush2.msra.mxu0 0.0
  %1467 = vmatprep.subr.mxu0 0.0
  %1468 = vmatpush2.msra.mxu0 %v1145
  %1469 = vmatprep.subr.mxu0 0.0
  %1470 = vmatpush2.msra.mxu0 %v1144
  %1471 = vmatprep.subr.mxu0 0.0
  %1472 = vmatpush2.msra.mxu0 %v1143
  %1473 = vmatprep.subr.mxu0 0.0
  %1474 = vmatpush2.msra.mxu0 %v1142
  %1475 = vmatprep.subr.mxu0 0.0
  %1476 = vmatpush2.msra.mxu0 %v1141
  %1477 = vmatprep.subr.mxu0 0.0
  %1478 = vmatpush2.msra.mxu0 %v1140
  %1479 = vmatprep.subr.mxu0 0.0
  %1480 = vmatpush2.msra.mxu0 %v1139
  %1481 = vmatprep.subr.mxu0 0.0
  %1482 = vmatpush2.msra.mxu0 %v1138
  %1483 = vmatprep.subr.mxu0 0.0
  %1484 = vmatpush2.msra.mxu0 %v1137
  %1485 = vmatprep.mubr.f32.mxu0 %v1347
  %1486 = vmatmul.mubr.f32.gmra.mxu0 %v1146
  %v1487 = vpop.f32.mrf.mxu0
  %v1488 = vadd.f32 %v1224, %v1487
  %v1489 = vpop.f32.mrf.mxu0
  %1490 = vmatprep.mubr.f32.mxu0 %v1350
  %1491 = vmatmul.mubr.f32.gmra.mxu0 %v1148
  %v1492 = vpop.f32.mrf.mxu0
  %v1493 = vadd.f32 %v1229, %v1492
  %v1494 = vpop.f32.mrf.mxu0
  %1495 = vmatprep.mubr.f32.mxu0 %v1353
  %1496 = vmatmul.mubr.f32.gmra.mxu0 %v1150
  %v1497 = vpop.f32.mrf.mxu0
  %v1498 = vadd.f32 %v1234, %v1497
  %v1499 = vpop.f32.mrf.mxu0
  %1500 = vmatprep.mubr.f32.mxu0 %v1356
  %1501 = vmatmul.mubr.f32.gmra.mxu0 %v1152
  %v1502 = vpop.f32.mrf.mxu0
  %v1503 = vadd.f32 %v1239, %v1502
  %v1504 = vpop.f32.mrf.mxu0
  %1505 = vmatprep.mubr.f32.mxu0 %v1359
  %1506 = vmatmul.mubr.f32.gmra.mxu0 %v1154
  %v1507 = vpop.f32.mrf.mxu0
  %v1508 = vadd.f32 %v1244, %v1507
  %v1509 = vpop.f32.mrf.mxu0
  %1510 = vmatprep.mubr.f32.mxu0 %v1362
  %1511 = vmatmul.mubr.f32.gmra.mxu0 %v1156
  %v1512 = vpop.f32.mrf.mxu0
  %v1513 = vadd.f32 %v1249, %v1512
  %v1514 = vpop.f32.mrf.mxu0
  %1515 = vmatprep.mubr.f32.mxu0 %v1365
  %1516 = vmatmul.mubr.f32.gmra.mxu0 %v1158
  %v1517 = vpop.f32.mrf.mxu0
  %v1518 = vadd.f32 %v1254, %v1517
  %v1519 = vpop.f32.mrf.mxu0
  %1520 = vmatprep.mubr.f32.mxu0 %v1368
  %1521 = vmatmul.mubr.f32.gmra.mxu0 %v1160
  %v1522 = vpop.f32.mrf.mxu0
  %v1523 = vadd.f32 %v1259, %v1522
  %v1524 = vpop.f32.mrf.mxu0
  %1525 = vmatprep.mubr.f32.mxu0 %v1371
  %1526 = vmatmul.mubr.f32.gmra.mxu0 %v1162
  %v1527 = vpop.f32.mrf.mxu0
  %v1528 = vadd.f32 %v1264, %v1527
  %v1529 = vpop.f32.mrf.mxu0
  %1530 = vmatprep.mubr.f32.mxu0 %v1374
  %1531 = vmatmul.mubr.f32.gmra.mxu0 %v1164
  %v1532 = vpop.f32.mrf.mxu0
  %v1533 = vadd.f32 %v1269, %v1532
  %v1534 = vpop.f32.mrf.mxu0
  %1535 = vmatprep.mubr.f32.mxu0 %v1377
  %1536 = vmatmul.mubr.f32.gmra.mxu0 %v1166
  %v1537 = vpop.f32.mrf.mxu0
  %v1538 = vadd.f32 %v1274, %v1537
  %v1539 = vpop.f32.mrf.mxu0
  %1540 = vmatprep.mubr.f32.mxu0 %v1380
  %1541 = vmatmul.mubr.f32.gmra.mxu0 %v1168
  %v1542 = vpop.f32.mrf.mxu0
  %v1543 = vadd.f32 %v1279, %v1542
  %v1544 = vpop.f32.mrf.mxu0
  %1545 = vmatprep.mubr.f32.mxu0 %v1383
  %1546 = vmatmul.mubr.f32.gmra.mxu0 %v1170
  %v1547 = vpop.f32.mrf.mxu0
  %v1548 = vadd.f32 %v1284, %v1547
  %v1549 = vpop.f32.mrf.mxu0
  %1550 = vmatprep.mubr.f32.mxu0 %v1386
  %1551 = vmatmul.mubr.f32.gmra.mxu0 %v1172
  %v1552 = vpop.f32.mrf.mxu0
  %v1553 = vadd.f32 %v1289, %v1552
  %v1554 = vpop.f32.mrf.mxu0
  %1555 = vmatprep.mubr.f32.mxu0 %v1389
  %1556 = vmatmul.mubr.f32.gmra.mxu0 %v1174
  %v1557 = vpop.f32.mrf.mxu0
  %v1558 = vadd.f32 %v1294, %v1557
  %v1559 = vpop.f32.mrf.mxu0
  %1560 = vmatprep.mubr.f32.mxu0 %v1392
  %1561 = vmatmul.mubr.f32.gmra.mxu0 %v1176
  %v1562 = vpop.f32.mrf.mxu0
  %v1563 = vadd.f32 %v1299, %v1562
  %v1564 = vpop.f32.mrf.mxu0
  %1565 = vmatprep.mubr.f32.mxu0 %v1395
  %1566 = vmatmul.mubr.f32.gmra.mxu0 %v1178
  %v1567 = vpop.f32.mrf.mxu0
  %v1568 = vadd.f32 %v1304, %v1567
  %v1569 = vpop.f32.mrf.mxu0
  %1570 = vmatprep.mubr.f32.mxu0 %v1398
  %1571 = vmatmul.mubr.f32.gmra.mxu0 %v1180
  %v1572 = vpop.f32.mrf.mxu0
  %v1573 = vadd.f32 %v1309, %v1572
  %v1574 = vpop.f32.mrf.mxu0
  %1575 = vmatprep.mubr.f32.mxu0 %v1401
  %1576 = vmatmul.mubr.f32.gmra.mxu0 %v1182
  %v1577 = vpop.f32.mrf.mxu0
  %v1578 = vadd.f32 %v1314, %v1577
  %v1579 = vpop.f32.mrf.mxu0
  %1580 = vmatprep.mubr.f32.mxu0 %v1404
  %1581 = vmatmul.mubr.f32.gmra.mxu0 %v1184
  %v1582 = vpop.f32.mrf.mxu0
  %v1583 = vadd.f32 %v1319, %v1582
  %v1584 = vpop.f32.mrf.mxu0
  %1585 = vmatprep.mubr.f32.mxu0 %v1407
  %1586 = vmatmul.mubr.f32.gmra.mxu0 %v1186
  %v1587 = vpop.f32.mrf.mxu0
  %v1588 = vadd.f32 %v1324, %v1587
  %v1589 = vpop.f32.mrf.mxu0
  %1590 = vmatprep.mubr.f32.mxu0 %v1410
  %1591 = vmatmul.mubr.f32.gmra.mxu0 %v1188
  %v1592 = vpop.f32.mrf.mxu0
  %v1593 = vadd.f32 %v1329, %v1592
  %v1594 = vpop.f32.mrf.mxu0
  %1595 = vmatprep.mubr.f32.mxu0 %v1413
  %1596 = vmatmul.mubr.f32.gmra.mxu0 %v1190
  %v1597 = vpop.f32.mrf.mxu0
  %v1598 = vadd.f32 %v1334, %v1597
  %v1599 = vpop.f32.mrf.mxu0
  %1600 = vmatprep.mubr.f32.mxu0 %v1416
  %1601 = vmatmul.mubr.f32.gmra.mxu0 %v1192
  %v1602 = vpop.f32.mrf.mxu0
  %v1603 = vadd.f32 %v1339, %v1602
  %v1604 = vpop.f32.mrf.mxu0
  %1605 = vmatprep.mubr.f32.mxu0 %v1419
  %1606 = vmatmul.mubr.f32.gmra.mxu0 %v1194
  %v1607 = vpop.f32.mrf.mxu0
  %v1608 = vadd.f32 %v1344, %v1607
  %v1609 = vpop.f32.mrf.mxu0
  %1610 = vdwg.mxu0
  %v1611 = vmul.f32 %v1488, 0.5
  %v1612 = vmul.f32 %v1493, 0.5
  %v1613 = vmul.f32 %v1498, 0.5
  %v1614 = vmul.f32 %v1503, 0.5
  %v1615 = vmul.f32 %v1508, 0.5
  %v1616 = vmul.f32 %v1513, 0.5
  %v1617 = vmul.f32 %v1518, 0.5
  %v1618 = vmul.f32 %v1523, 0.5
  %v1619 = vmul.f32 %v1528, 0.5
  %v1620 = vmul.f32 %v1533, 0.5
  %v1621 = vmul.f32 %v1538, 0.5
  %v1622 = vmul.f32 %v1543, 0.5
  %v1623 = vmul.f32 %v1548, 0.5
  %v1624 = vmul.f32 %v1553, 0.5
  %v1625 = vmul.f32 %v1558, 0.5
  %v1626 = vmul.f32 %v1563, 0.5
  %v1627 = vmul.f32 %v1568, 0.5
  %v1628 = vmul.f32 %v1573, 0.5
  %v1629 = vmul.f32 %v1578, 0.5
  %v1630 = vmul.f32 %v1583, 0.5
  %v1631 = vmul.f32 %v1588, 0.5
  %v1632 = vmul.f32 %v1593, 0.5
  %v1633 = vmul.f32 %v1598, 0.5
  %v1634 = vmul.f32 %v1603, 0.5
  %v1635 = vmul.f32 %v1608, 0.5
  %v1636 = vtanh.pop %v1611
  %v1637 = vtanh.pop %v1612
  %v1638 = vtanh.pop %v1613
  %v1639 = vtanh.pop %v1614
  %v1640 = vtanh.pop %v1615
  %v1641 = vtanh.pop %v1616
  %v1642 = vtanh.pop %v1617
  %v1643 = vtanh.pop %v1618
  %v1644 = vtanh.pop %v1619
  %v1645 = vtanh.pop %v1620
  %v1646 = vtanh.pop %v1621
  %v1647 = vtanh.pop %v1622
  %v1648 = vtanh.pop %v1623
  %v1649 = vtanh.pop %v1624
  %v1650 = vtanh.pop %v1625
  %v1651 = vtanh.pop %v1626
  %v1652 = vtanh.pop %v1627
  %v1653 = vtanh.pop %v1628
  %v1654 = vtanh.pop %v1629
  %v1655 = vtanh.pop %v1630
  %v1656 = vtanh.pop %v1631
  %v1657 = vtanh.pop %v1632
  %v1658 = vtanh.pop %v1633
  %v1659 = vtanh.pop %v1634
  %v1660 = vtanh.pop %v1635
  %v1661 = vadd.f32 %v1636, 1.0
  %v1662 = vadd.f32 %v1637, 1.0
  %v1663 = vadd.f32 %v1638, 1.0
  %v1664 = vadd.f32 %v1639, 1.0
  %v1665 = vadd.f32 %v1640, 1.0
  %v1666 = vadd.f32 %v1641, 1.0
  %v1667 = vadd.f32 %v1642, 1.0
  %v1668 = vadd.f32 %v1643, 1.0
  %v1669 = vadd.f32 %v1644, 1.0
  %v1670 = vadd.f32 %v1645, 1.0
  %v1671 = vadd.f32 %v1646, 1.0
  %v1672 = vadd.f32 %v1647, 1.0
  %v1673 = vadd.f32 %v1648, 1.0
  %v1674 = vadd.f32 %v1649, 1.0
  %v1675 = vadd.f32 %v1650, 1.0
  %v1676 = vadd.f32 %v1651, 1.0
  %v1677 = vadd.f32 %v1652, 1.0
  %v1678 = vadd.f32 %v1653, 1.0
  %v1679 = vadd.f32 %v1654, 1.0
  %v1680 = vadd.f32 %v1655, 1.0
  %v1681 = vadd.f32 %v1656, 1.0
  %v1682 = vadd.f32 %v1657, 1.0
  %v1683 = vadd.f32 %v1658, 1.0
  %v1684 = vadd.f32 %v1659, 1.0
  %v1685 = vadd.f32 %v1660, 1.0
  %v1686 = vmul.f32 %v1611, %v1661
  %v1687 = vmul.f32 %v1612, %v1662
  %v1688 = vmul.f32 %v1613, %v1663
  %v1689 = vmul.f32 %v1614, %v1664
  %v1690 = vmul.f32 %v1615, %v1665
  %v1691 = vmul.f32 %v1616, %v1666
  %v1692 = vmul.f32 %v1617, %v1667
  %v1693 = vmul.f32 %v1618, %v1668
  %v1694 = vmul.f32 %v1619, %v1669
  %v1695 = vmul.f32 %v1620, %v1670
  %v1696 = vmul.f32 %v1621, %v1671
  %v1697 = vmul.f32 %v1622, %v1672
  %v1698 = vmul.f32 %v1623, %v1673
  %v1699 = vmul.f32 %v1624, %v1674
  %v1700 = vmul.f32 %v1625, %v1675
  %v1701 = vmul.f32 %v1626, %v1676
  %v1702 = vmul.f32 %v1627, %v1677
  %v1703 = vmul.f32 %v1628, %v1678
  %v1704 = vmul.f32 %v1629, %v1679
  %v1705 = vmul.f32 %v1630, %v1680
  %v1706 = vmul.f32 %v1631, %v1681
  %v1707 = vmul.f32 %v1632, %v1682
  %v1708 = vmul.f32 %v1633, %v1683
  %v1709 = vmul.f32 %v1634, %v1684
  %v1710 = vmul.f32 %v1635, %v1685
  %v1711 = vld [vmem:[%s7] sm:$0x3]
  %v1712 = vld [vmem:[#allocation2] sm:$0x1]
  %1714 = vset.pattern.permute.xlu0 0
  %1715 = vperm.xlu0 %1714, %v1712
  %v1716 = vpop.permute.xlu0 %1715
  %v1718 = vlaneseq
  %v1719 = vshrl.u32 %v1718, 7
  %v1720 = vsub.s32 0, %v1719
  %v1721 = vrot.slane %v1716, %v1720
  %v1723 = vlaneseq
  %v1724 = vshrl.u32 %v1723, 7
  %v1725 = vsub.s32 0, %v1724
  %v1726 = vrot.slane %v1711, %v1725
  %v1727 = vlaneseq
  %v1728 = vshrl.u32 %v1727, 7
  %v1729 = vsub.s32 1, %v1728
  %v1730 = vrot.slane %v1711, %v1729
  %v1732 = vsel %vm780, %v1730, 0
  %1734 = vmatprep.subr.mxu0 0.0
  %1735 = vmatpush1.msra.mxu0 %v1701
  %1736 = vmatprep.subr.mxu0 0.0
  %1737 = vmatpush1.msra.mxu0 %v1700
  %1738 = vmatprep.subr.mxu0 0.0
  %1739 = vmatpush1.msra.mxu0 %v1699
  %1740 = vmatprep.subr.mxu0 0.0
  %1741 = vmatpush1.msra.mxu0 %v1698
  %1742 = vmatprep.subr.mxu0 0.0
  %1743 = vmatpush1.msra.mxu0 %v1697
  %1744 = vmatprep.subr.mxu0 0.0
  %1745 = vmatpush1.msra.mxu0 %v1696
  %1746 = vmatprep.subr.mxu0 0.0
  %1747 = vmatpush1.msra.mxu0 %v1695
  %1748 = vmatprep.subr.mxu0 0.0
  %1749 = vmatpush1.msra.mxu0 %v1694
  %1750 = vmatprep.subr.mxu0 0.0
  %1751 = vmatpush1.msra.mxu0 %v1693
  %1752 = vmatprep.subr.mxu0 0.0
  %1753 = vmatpush1.msra.mxu0 %v1692
  %1754 = vmatprep.subr.mxu0 0.0
  %1755 = vmatpush1.msra.mxu0 %v1691
  %1756 = vmatprep.subr.mxu0 0.0
  %1757 = vmatpush1.msra.mxu0 %v1690
  %1758 = vmatprep.subr.mxu0 0.0
  %1759 = vmatpush1.msra.mxu0 %v1689
  %1760 = vmatprep.subr.mxu0 0.0
  %1761 = vmatpush1.msra.mxu0 %v1688
  %1762 = vmatprep.subr.mxu0 0.0
  %1763 = vmatpush1.msra.mxu0 %v1687
  %1764 = vmatprep.subr.mxu0 0.0
  %1765 = vmatpush1.msra.mxu0 %v1686
  %1766 = vmatprep.subr.mxu0 0.0
  %1767 = vmatpush2.msra.mxu0 0.0
  %1768 = vmatprep.subr.mxu0 0.0
  %1769 = vmatpush2.msra.mxu0 0.0
  %1770 = vmatprep.subr.mxu0 0.0
  %1771 = vmatpush2.msra.mxu0 0.0
  %1772 = vmatprep.subr.mxu0 0.0
  %1773 = vmatpush2.msra.mxu0 0.0
  %1774 = vmatprep.subr.mxu0 0.0
  %1775 = vmatpush2.msra.mxu0 0.0
  %1776 = vmatprep.subr.mxu0 0.0
  %1777 = vmatpush2.msra.mxu0 0.0
  %1778 = vmatprep.subr.mxu0 0.0
  %1779 = vmatpush2.msra.mxu0 0.0
  %1780 = vmatprep.subr.mxu0 0.0
  %1781 = vmatpush2.msra.mxu0 %v1710
  %1782 = vmatprep.subr.mxu0 0.0
  %1783 = vmatpush2.msra.mxu0 %v1709
  %1784 = vmatprep.subr.mxu0 0.0
  %1785 = vmatpush2.msra.mxu0 %v1708
  %1786 = vmatprep.subr.mxu0 0.0
  %1787 = vmatpush2.msra.mxu0 %v1707
  %1788 = vmatprep.subr.mxu0 0.0
  %1789 = vmatpush2.msra.mxu0 %v1706
  %1790 = vmatprep.subr.mxu0 0.0
  %1791 = vmatpush2.msra.mxu0 %v1705
  %1792 = vmatprep.subr.mxu0 0.0
  %1793 = vmatpush2.msra.mxu0 %v1704
  %1794 = vmatprep.subr.mxu0 0.0
  %1795 = vmatpush2.msra.mxu0 %v1703
  %1796 = vmatprep.subr.mxu0 0.0
  %1797 = vmatpush2.msra.mxu0 %v1702
  %1798 = vmatprep.mubr.f32.mxu0 %v1732
  %1799 = vmatmul.mubr.f32.gmra.mxu0 %v1726
  %v1800 = vpop.f32.mrf.mxu0
  %v1801 = vadd.f32 %v1721, %v1800
  %v1802 = vpop.f32.mrf.mxu0
  %1803 = vdwg.mxu0
  %1804 = vst [vmem:[%s9] sm:$0x1] %v1801
  // Predicated region
  $region38: #{fcnet_forward.1} parent=0 // pred_check
    _
  $region39: #{fcnet_forward.1} parent=0 // pred_check_branch
    %1806 = sbr.rel (0) target = $region41
  $region40: #{fcnet_forward.1} parent=0 // pred_region
    _
  $region41: #{fcnet_forward.1} parent=0 // pred_fallthru
    _
  // Predicated region
  $region42: #{fcnet_forward.1} parent=0 // pred_check
    _
  $region43: #{fcnet_forward.1} parent=0 // pred_check_branch
    %1808 = sbr.rel (0) target = $region45
  $region44: #{fcnet_forward.1} parent=0 // pred_region
    _
  $region45: #{fcnet_forward.1} parent=0 // pred_fallthru
    _

</llo_original>
